<compile_context>
chip_gen: v5e
topology: v5e:2x2
jax: 0.10.0
libtpu: 0.0.40
codegen_flags: <defaults>
</compile_context>

<pallas_src>
import functools

import jax
import jax.numpy as jnp
from jax import lax
from jax.experimental import pallas as pl
from jax.experimental.pallas import tpu as pltpu


# ---------------- elementwise helpers (used INSIDE the kernel) ---------------

def _relu(v):
    return jnp.maximum(v, 0.0)


def _softplus(v):
    # numerically stable softplus
    return jnp.maximum(v, 0.0) + jnp.log(1.0 + jnp.exp(-jnp.abs(v)))


def _sigmoid(v):
    # EUP reciprocal keeps the divide off the VALU slot.
    return pl.reciprocal(1.0 + jnp.exp(-v), approx=True)


# ------------------------------ fused kernel --------------------------------

def _vgrnn_kernel(x_ref, a_ref, adj_ref, noise_ref, *rest,
                  n_layers, n_weights, eps):
    w_refs = rest[:n_weights]
    enc_mean_ref, prior_mean_ref, h_ref, kld_ref, nll_ref = rest[n_weights:]

    (wpx, bpx, wpz, bpz,
     wenc_x, wenc_h, benc,
     wems, bems,
     wpr, bpr, wpms, bpms) = w_refs[:13]
    rnn_refs = w_refs[13:]

    t = pl.program_id(0)
    n = a_ref.shape[1]
    h_dim = h_ref.shape[2]
    z_dim = noise_ref.shape[2]
    f32 = jnp.float32

    # ---- init carried state / loss accumulators at t == 0 (hidden_in=None) -
    @pl.when(t == 0)
    def _():
        h_ref[...] = jnp.zeros_like(h_ref)
        kld_ref[...] = jnp.zeros_like(kld_ref)
        nll_ref[...] = jnp.zeros_like(nll_ref)

    x_t = x_ref[0]            # (N, x_dim)
    a = a_ref[0]              # (N, N)  normalized adjacency
    adj = adj_ref[0]          # (N, N)  raw adjacency (NLL target)
    noise_t = noise_ref[0]    # (N, z_dim)

    def mm(p, q):
        return jnp.dot(p, q, preferred_element_type=f32)

    # ---- phi_x --------------------------------------------------------------
    phi_x = _relu(mm(x_t, wpx[...]) + bpx[...])                  # (N, h)

    h_prev = [h_ref[i] for i in range(n_layers)]
    h_last = h_prev[n_layers - 1]

    # shared A-propagations:  A @ (X @ W) == (A @ X) @ W
    a_phi_x = mm(a, phi_x)                                       # (N, h)
    a_h = [mm(a, h_prev[i]) for i in range(n_layers)]
    a_h_last = a_h[n_layers - 1]

    # ---- encoder: GCNConv(cat[phi_x, h_last]) via split weights -------------
    enc_t = _relu(mm(a_phi_x, wenc_x[...]) + mm(a_h_last, wenc_h[...])
                  + benc[...])                                   # (N, h)
    a_enc = mm(a, enc_t)
    # fused [W_mean | W_std]  -> lane-dense (N, 2*z_dim)
    # (GCNConv default act = relu, then the extra explicit Softplus on std)
    enc_ms = _relu(mm(a_enc, wems[...]) + bems[...])
    enc_mean = enc_ms[:, :z_dim]
    enc_std = _softplus(enc_ms[:, z_dim:])

    # ---- prior ---------------------------------------------------------------
    prior_t = _relu(mm(h_last, wpr[...]) + bpr[...])
    prior_ms = mm(prior_t, wpms[...]) + bpms[...]                # (N, 2*z_dim)
    prior_mean = prior_ms[:, :z_dim]
    prior_std = _softplus(prior_ms[:, z_dim:])

    # ---- reparameterized sample + phi_z --------------------------------------
    z_t = noise_t * enc_std + enc_mean                           # (N, z)
    phi_z = _relu(mm(z_t, wpz[...]) + bpz[...])                  # (N, h)

    # ---- fused InnerProductDecoder + Bernoulli NLL (dec never hits HBM) ------
    dec = _sigmoid(lax.dot_general(z_t, z_t, (((1,), (1,)), ((), ())),
                                   preferred_element_type=f32))  # (N, N)
    nn_f = f32(n * n)
    s = jnp.sum(jnp.sum(adj, axis=1, keepdims=True), axis=0, keepdims=True)
    posw = (nn_f - s) / s
    norm = nn_f / ((nn_f - s) * 2.0)
    # BCE-with-logits with pos_weight (stable form); keeps the original repo's
    # quirk of feeding the post-sigmoid decoder output as "logits".
    log_w = 1.0 + (posw - 1.0) * adj
    bce = (1.0 - adj) * dec + log_w * (jnp.log(1.0 + jnp.exp(-jnp.abs(dec)))
                                       + jnp.maximum(-dec, 0.0))
    nll_t = norm * (jnp.sum(jnp.sum(bce, axis=1, keepdims=True),
                            axis=0, keepdims=True) / nn_f)        # (1, 1)

    # ---- KLD(q || p) ----------------------------------------------------------
    s1 = enc_std + eps
    s2 = prior_std + eps
    dm = enc_mean - prior_mean
    el = (2.0 * jnp.log(s2) - 2.0 * jnp.log(s1)
          + (s1 * s1 + dm * dm) / (s2 * s2) - 1.0)
    kld_t = 0.5 * jnp.sum(jnp.sum(el, axis=1, keepdims=True),
                          axis=0, keepdims=True) / nn_f           # (1, 1)

    kld_ref[...] = kld_ref[...] + kld_t
    nll_ref[...] = nll_ref[...] + nll_t

    # ---- graph GRU: lane-fused gates, shared A-propagation --------------------
    a_phi_z = mm(a, phi_z)
    h_new = []
    ridx = 0
    for i in range(n_layers):
        if i == 0:
            wx_top, wx_bot, whzr, whh = rnn_refs[ridx:ridx + 4]
            ridx += 4
            # rnn_in = cat([phi_x, phi_z]);  (A@rnn_in)@Wx == split-row form
            gx = mm(a_phi_x, wx_top[...]) + mm(a_phi_z, wx_bot[...])  # (N, 3h)
        else:
            wx, whzr, whh = rnn_refs[ridx:ridx + 3]
            ridx += 3
            gx = mm(mm(a, h_new[i - 1]), wx[...])                      # (N, 3h)
        h_i = h_prev[i]
        ghzr = mm(a_h[i], whzr[...])                                   # (N, 2h)
        z_g = _sigmoid(gx[:, :h_dim] + ghzr[:, :h_dim])
        r_g = _sigmoid(gx[:, h_dim:2 * h_dim] + ghzr[:, h_dim:])
        h_tilde = jnp.tanh(gx[:, 2 * h_dim:] + mm(mm(a, r_g * h_i), whh[...]))
        h_new.append(z_g * h_i + (1.0 - z_g) * h_tilde)

    for i in range(n_layers):
        h_ref[i] = h_new[i]

    # ---- per-step statistics outputs ------------------------------------------
    enc_mean_ref[0] = enc_mean
    prior_mean_ref[0] = prior_mean


# ------------------------------- model glue ---------------------------------

def init_params(key, x_dim, h_dim, z_dim, n_layers, stdv=0.1):
    keys = iter(jax.random.split(key, 64))

    def w(shape):
        return (stdv * jax.random.normal(next(keys), shape)).astype(jnp.float32)

    p = {
        'phi_x_w': w((x_dim, h_dim)), 'phi_x_b': w((1, h_dim)),
        'phi_z_w': w((z_dim, h_dim)), 'phi_z_b': w((1, h_dim)),
        'enc_w': w((2 * h_dim, h_dim)), 'enc_b': w((1, h_dim)),
        'enc_mean_w': w((h_dim, z_dim)), 'enc_mean_b': w((1, z_dim)),
        'enc_std_w': w((h_dim, z_dim)), 'enc_std_b': w((1, z_dim)),
        'prior_w': w((h_dim, h_dim)), 'prior_b': w((1, h_dim)),
        'prior_mean_w': w((h_dim, z_dim)), 'prior_mean_b': w((1, z_dim)),
        'prior_std_w': w((h_dim, z_dim)), 'prior_std_b': w((1, z_dim)),
    }
    rnn = []
    for i in range(n_layers):
        in_dim = 2 * h_dim if i == 0 else h_dim   # VGRNN passes bias=False to the rnn
        rnn.append({
            'wxz': w((in_dim, h_dim)), 'whz': w((h_dim, h_dim)),
            'wxr': w((in_dim, h_dim)), 'whr': w((h_dim, h_dim)),
            'wxh': w((in_dim, h_dim)), 'whh': w((h_dim, h_dim)),
        })
    p['rnn'] = rnn
    return p


def _fuse_weights(params, h_dim):
    """One-time lane-fusion / splitting of parameters for the fused kernel."""
    wenc = params['enc_w']
    weights = [
        params['phi_x_w'], params['phi_x_b'],
        params['phi_z_w'], params['phi_z_b'],
        wenc[:h_dim], wenc[h_dim:], params['enc_b'],
        jnp.concatenate([params['enc_mean_w'], params['enc_std_w']], axis=1),
        jnp.concatenate([params['enc_mean_b'], params['enc_std_b']], axis=1),
        params['prior_w'], params['prior_b'],
        jnp.concatenate([params['prior_mean_w'], params['prior_std_w']], axis=1),
        jnp.concatenate([params['prior_mean_b'], params['prior_std_b']], axis=1),
    ]
    for i, lp in enumerate(params['rnn']):
        wx = jnp.concatenate([lp['wxz'], lp['wxr'], lp['wxh']], axis=1)   # (in, 3h)
        whzr = jnp.concatenate([lp['whz'], lp['whr']], axis=1)            # (h, 2h)
        if i == 0:
            weights += [wx[:h_dim], wx[h_dim:], whzr, lp['whh']]
        else:
            weights += [wx, whzr, lp['whh']]
    return weights


@functools.partial(jax.jit, static_argnames=("eps", "n_layers", "h_dim", "z_dim"))
def vgrnn_forward(params, x_seq, a_hat_seq, adj_seq, noise, *,
                  eps, n_layers, h_dim, z_dim):
    T, N, x_dim = x_seq.shape
    weights = _fuse_weights(params, h_dim)

    def t_spec(tail):
        return pl.BlockSpec((1,) + tail, lambda t: (t,) + (0,) * len(tail))

    def full_spec(arr):
        return pl.BlockSpec(arr.shape, lambda t: (0,) * arr.ndim)

    scalar_spec = pl.BlockSpec((1, 1), lambda t: (0, 0))

    in_specs = ([t_spec((N, x_dim)), t_spec((N, N)), t_spec((N, N)),
                 t_spec((N, z_dim))]
                + [full_spec(w) for w in weights])

    out_shape = (
        jax.ShapeDtypeStruct((T, N, z_dim), jnp.float32),         # all_enc_mean
        jax.ShapeDtypeStruct((T, N, z_dim), jnp.float32),         # all_prior_mean
        jax.ShapeDtypeStruct((n_layers, N, h_dim), jnp.float32),  # h (carried)
        jax.ShapeDtypeStruct((1, 1), jnp.float32),                # kld accumulator
        jax.ShapeDtypeStruct((1, 1), jnp.float32),                # nll accumulator
    )
    out_specs = (
        t_spec((N, z_dim)),
        t_spec((N, z_dim)),
        pl.BlockSpec((n_layers, N, h_dim), lambda t: (0, 0, 0)),
        scalar_spec,
        scalar_spec,
    )

    kernel = functools.partial(_vgrnn_kernel, n_layers=n_layers,
                               n_weights=len(weights), eps=eps)

    enc_mean, prior_mean, h, kld, nll = pl.pallas_call(
        kernel,
        grid=(T,),
        in_specs=in_specs,
        out_specs=out_specs,
        out_shape=out_shape,
        compiler_params=pltpu.CompilerParams(
            dimension_semantics=("arbitrary",),
            vmem_limit_bytes=32 * 1024 * 1024),
    )(x_seq, a_hat_seq, adj_seq, noise, *weights)

    all_enc_mean = [enc_mean[t] for t in range(T)]
    all_prior_mean = [prior_mean[t] for t in range(T)]
    return kld[0, 0], nll[0, 0], all_enc_mean, all_prior_mean, h


def normalize_adj(adj, n):
    a = adj + jnp.eye(n, dtype=jnp.float32)          # self loops
    deg = jnp.sum(a, axis=1)
    d_inv_sqrt = 1.0 / jnp.sqrt(deg)
    return a * d_inv_sqrt[:, None] * d_inv_sqrt[None, :]


def make_adj(key, n, p=0.3):
    u = jax.random.uniform(key, (n, n))
    a = (u < p).astype(jnp.float32)
    a = jnp.maximum(a, a.T)
    a = a * (1.0 - jnp.eye(n, dtype=jnp.float32))
    a = a.at[0, 1].set(1.0).at[1, 0].set(1.0)        # guarantee >= 1 edge
    return a


if __name__ == "__main__":
    T, N = 4, 16
    x_dim, h_dim, z_dim, n_layers = 8, 32, 16, 2
    eps = 1e-10

    key = jax.random.PRNGKey(0)
    k_par, k_x, k_adj, k_noise = jax.random.split(key, 4)

    params = init_params(k_par, x_dim, h_dim, z_dim, n_layers)
    x = jax.random.normal(k_x, (T, N, x_dim), jnp.float32)
    adj_keys = jax.random.split(k_adj, T)
    adj_seq = jnp.stack([make_adj(adj_keys[t], N) for t in range(T)], axis=0)
    a_hat_seq = jnp.stack([normalize_adj(adj_seq[t], N) for t in range(T)],
                          axis=0)
    noise = jax.random.normal(k_noise, (T, N, z_dim), jnp.float32)

    kld, nll, all_enc_mean, all_prior_mean, h = vgrnn_forward(
        params, x, a_hat_seq, adj_seq, noise,
        eps=eps, n_layers=n_layers, h_dim=h_dim, z_dim=z_dim)

    jax.block_until_ready((kld, nll, h))
    print("KERNEL_OK")
</pallas_src>

<mosaic_0001>
module attributes {stable_mosaic.version = 11 : i64} {
  func.func @_vgrnn_kernel(%arg0: i32, %arg1: memref<1x16x8xf32, #tpu.memory_space<vmem>>, %arg2: memref<1x16x16xf32, #tpu.memory_space<vmem>>, %arg3: memref<1x16x16xf32, #tpu.memory_space<vmem>>, %arg4: memref<1x16x16xf32, #tpu.memory_space<vmem>>, %arg5: memref<8x32xf32, #tpu.memory_space<vmem>>, %arg6: memref<1x32xf32, #tpu.memory_space<vmem>>, %arg7: memref<16x32xf32, #tpu.memory_space<vmem>>, %arg8: memref<1x32xf32, #tpu.memory_space<vmem>>, %arg9: memref<32x32xf32, #tpu.memory_space<vmem>>, %arg10: memref<32x32xf32, #tpu.memory_space<vmem>>, %arg11: memref<1x32xf32, #tpu.memory_space<vmem>>, %arg12: memref<32x32xf32, #tpu.memory_space<vmem>>, %arg13: memref<1x32xf32, #tpu.memory_space<vmem>>, %arg14: memref<32x32xf32, #tpu.memory_space<vmem>>, %arg15: memref<1x32xf32, #tpu.memory_space<vmem>>, %arg16: memref<32x32xf32, #tpu.memory_space<vmem>>, %arg17: memref<1x32xf32, #tpu.memory_space<vmem>>, %arg18: memref<32x96xf32, #tpu.memory_space<vmem>>, %arg19: memref<32x96xf32, #tpu.memory_space<vmem>>, %arg20: memref<32x64xf32, #tpu.memory_space<vmem>>, %arg21: memref<32x32xf32, #tpu.memory_space<vmem>>, %arg22: memref<32x96xf32, #tpu.memory_space<vmem>>, %arg23: memref<32x64xf32, #tpu.memory_space<vmem>>, %arg24: memref<32x32xf32, #tpu.memory_space<vmem>>, %arg25: memref<1x16x16xf32, #tpu.memory_space<vmem>>, %arg26: memref<1x16x16xf32, #tpu.memory_space<vmem>>, %arg27: memref<2x16x32xf32, #tpu.memory_space<vmem>>, %arg28: memref<1x1xf32, #tpu.memory_space<vmem>>, %arg29: memref<1x1xf32, #tpu.memory_space<vmem>>) attributes {dimension_semantics = [#tpu.dimension_semantics<arbitrary>], iteration_bounds = array<i64: 4>, scalar_prefetch = 0 : i64, scratch_operands = 0 : i64, tpu.core_type = #tpu.core_type<tc>, window_params = [{transform_indices = @transform_0, window_bounds = array<i64: 1, 16, 8>}, {transform_indices = @transform_1, window_bounds = array<i64: 1, 16, 16>}, {transform_indices = @transform_2, window_bounds = array<i64: 1, 16, 16>}, {transform_indices = @transform_3, window_bounds = array<i64: 1, 16, 16>}, {pipeline_mode = #tpu.pipeline_mode<synchronous>, transform_indices = @transform_4, window_bounds = array<i64: 8, 32>}, {pipeline_mode = #tpu.pipeline_mode<synchronous>, transform_indices = @transform_5, window_bounds = array<i64: 1, 32>}, {pipeline_mode = #tpu.pipeline_mode<synchronous>, transform_indices = @transform_6, window_bounds = array<i64: 16, 32>}, {pipeline_mode = #tpu.pipeline_mode<synchronous>, transform_indices = @transform_7, window_bounds = array<i64: 1, 32>}, {pipeline_mode = #tpu.pipeline_mode<synchronous>, transform_indices = @transform_8, window_bounds = array<i64: 32, 32>}, {pipeline_mode = #tpu.pipeline_mode<synchronous>, transform_indices = @transform_9, window_bounds = array<i64: 32, 32>}, {pipeline_mode = #tpu.pipeline_mode<synchronous>, transform_indices = @transform_10, window_bounds = array<i64: 1, 32>}, {pipeline_mode = #tpu.pipeline_mode<synchronous>, transform_indices = @transform_11, window_bounds = array<i64: 32, 32>}, {pipeline_mode = #tpu.pipeline_mode<synchronous>, transform_indices = @transform_12, window_bounds = array<i64: 1, 32>}, {pipeline_mode = #tpu.pipeline_mode<synchronous>, transform_indices = @transform_13, window_bounds = array<i64: 32, 32>}, {pipeline_mode = #tpu.pipeline_mode<synchronous>, transform_indices = @transform_14, window_bounds = array<i64: 1, 32>}, {pipeline_mode = #tpu.pipeline_mode<synchronous>, transform_indices = @transform_15, window_bounds = array<i64: 32, 32>}, {pipeline_mode = #tpu.pipeline_mode<synchronous>, transform_indices = @transform_16, window_bounds = array<i64: 1, 32>}, {pipeline_mode = #tpu.pipeline_mode<synchronous>, transform_indices = @transform_17, window_bounds = array<i64: 32, 96>}, {pipeline_mode = #tpu.pipeline_mode<synchronous>, transform_indices = @transform_18, window_bounds = array<i64: 32, 96>}, {pipeline_mode = #tpu.pipeline_mode<synchronous>, transform_indices = @transform_19, window_bounds = array<i64: 32, 64>}, {pipeline_mode = #tpu.pipeline_mode<synchronous>, transform_indices = @transform_20, window_bounds = array<i64: 32, 32>}, {pipeline_mode = #tpu.pipeline_mode<synchronous>, transform_indices = @transform_21, window_bounds = array<i64: 32, 96>}, {pipeline_mode = #tpu.pipeline_mode<synchronous>, transform_indices = @transform_22, window_bounds = array<i64: 32, 64>}, {pipeline_mode = #tpu.pipeline_mode<synchronous>, transform_indices = @transform_23, window_bounds = array<i64: 32, 32>}, {transform_indices = @transform_24, window_bounds = array<i64: 1, 16, 16>}, {transform_indices = @transform_25, window_bounds = array<i64: 1, 16, 16>}, {pipeline_mode = #tpu.pipeline_mode<synchronous>, transform_indices = @transform_26, window_bounds = array<i64: 2, 16, 32>}, {pipeline_mode = #tpu.pipeline_mode<synchronous>, transform_indices = @transform_27, window_bounds = array<i64: 1, 1>}, {pipeline_mode = #tpu.pipeline_mode<synchronous>, transform_indices = @transform_28, window_bounds = array<i64: 1, 1>}]} {
    %c0_i32 = arith.constant 0 : i32
    %0 = arith.cmpi eq, %arg0, %c0_i32 : i32
    %1 = arith.extui %0 : i1 to i32
    %c0_i32_0 = arith.constant 0 : i32
    %2 = arith.cmpi ne, %1, %c0_i32_0 : i32
    scf.if %2 {
      %cst_147 = arith.constant 0.000000e+00 : f32
      %257 = vector.broadcast %cst_147 : f32 to vector<2x16x32xf32>
      %c0_148 = arith.constant 0 : index
      %c0_149 = arith.constant 0 : index
      %c0_150 = arith.constant 0 : index
      %258 = vector.load %arg27[%c0_148, %c0_149, %c0_150] : memref<2x16x32xf32, #tpu.memory_space<vmem>>, vector<2x16x32xf32>
      tpu.vector_store %arg27[%c0_148, %c0_149, %c0_150], %257 {strides = array<i32>} : memref<2x16x32xf32, #tpu.memory_space<vmem>>, vector<2x16x32xf32>,
      %cst_151 = arith.constant 0.000000e+00 : f32
      %259 = vector.broadcast %cst_151 : f32 to vector<1x1xf32>
      %c0_152 = arith.constant 0 : index
      %c0_153 = arith.constant 0 : index
      %260 = vector.load %arg28[%c0_152, %c0_153] : memref<1x1xf32, #tpu.memory_space<vmem>>, vector<1x1xf32>
      tpu.vector_store %arg28[%c0_152, %c0_153], %259 {strides = array<i32>} : memref<1x1xf32, #tpu.memory_space<vmem>>, vector<1x1xf32>,
      %cst_154 = arith.constant 0.000000e+00 : f32
      %261 = vector.broadcast %cst_154 : f32 to vector<1x1xf32>
      %c0_155 = arith.constant 0 : index
      %c0_156 = arith.constant 0 : index
      %262 = vector.load %arg29[%c0_155, %c0_156] : memref<1x1xf32, #tpu.memory_space<vmem>>, vector<1x1xf32>
      tpu.vector_store %arg29[%c0_155, %c0_156], %261 {strides = array<i32>} : memref<1x1xf32, #tpu.memory_space<vmem>>, vector<1x1xf32>,
    } else {
    }
    %c0 = arith.constant 0 : index
    %c0_1 = arith.constant 0 : index
    %c0_2 = arith.constant 0 : index
    %3 = vector.load %arg1[%c0, %c0_1, %c0_2] : memref<1x16x8xf32, #tpu.memory_space<vmem>>, vector<1x16x8xf32>
    %4 = vector.shape_cast %3 : vector<1x16x8xf32> to vector<16x8xf32>
    %c0_3 = arith.constant 0 : index
    %c0_4 = arith.constant 0 : index
    %c0_5 = arith.constant 0 : index
    %5 = vector.load %arg2[%c0_3, %c0_4, %c0_5] : memref<1x16x16xf32, #tpu.memory_space<vmem>>, vector<1x16x16xf32>
    %6 = vector.shape_cast %5 : vector<1x16x16xf32> to vector<16x16xf32>
    %c0_6 = arith.constant 0 : index
    %c0_7 = arith.constant 0 : index
    %c0_8 = arith.constant 0 : index
    %7 = vector.load %arg3[%c0_6, %c0_7, %c0_8] : memref<1x16x16xf32, #tpu.memory_space<vmem>>, vector<1x16x16xf32>
    %8 = vector.shape_cast %7 : vector<1x16x16xf32> to vector<16x16xf32>
    %c0_9 = arith.constant 0 : index
    %c0_10 = arith.constant 0 : index
    %c0_11 = arith.constant 0 : index
    %9 = vector.load %arg4[%c0_9, %c0_10, %c0_11] : memref<1x16x16xf32, #tpu.memory_space<vmem>>, vector<1x16x16xf32>
    %10 = vector.shape_cast %9 : vector<1x16x16xf32> to vector<16x16xf32>
    %c0_12 = arith.constant 0 : index
    %c0_13 = arith.constant 0 : index
    %11 = vector.load %arg5[%c0_12, %c0_13] : memref<8x32xf32, #tpu.memory_space<vmem>>, vector<8x32xf32>
    %cst = arith.constant dense<0.000000e+00> : vector<16x32xf32>
    %12 = tpu.matmul %4, %11, %cst {dimension_numbers = #tpu.dot_dimension_numbers<[1], [0], [0], [1], [0, 0, 1, 1], [], []>} : vector<16x8xf32>, vector<8x32xf32>, vector<16x32xf32> -> vector<16x32xf32>
    %c0_14 = arith.constant 0 : index
    %c0_15 = arith.constant 0 : index
    %13 = vector.load %arg6[%c0_14, %c0_15] : memref<1x32xf32, #tpu.memory_space<vmem>>, vector<1x32xf32>
    %14 = vector.broadcast %13 : vector<1x32xf32> to vector<16x32xf32>
    %15 = arith.addf %12, %14 : vector<16x32xf32>
    %cst_16 = arith.constant 0.000000e+00 : f32
    %16 = vector.broadcast %cst_16 : f32 to vector<16x32xf32>
    %17 = arith.maximumf %15, %16 : vector<16x32xf32>
    %c0_17 = arith.constant 0 : index
    %c0_18 = arith.constant 0 : index
    %c0_19 = arith.constant 0 : index
    %18 = vector.load %arg27[%c0_17, %c0_18, %c0_19] : memref<2x16x32xf32, #tpu.memory_space<vmem>>, vector<1x16x32xf32>
    %19 = vector.shape_cast %18 : vector<1x16x32xf32> to vector<16x32xf32>
    %c1 = arith.constant 1 : index
    %c0_20 = arith.constant 0 : index
    %c0_21 = arith.constant 0 : index
    %20 = vector.load %arg27[%c1, %c0_20, %c0_21] : memref<2x16x32xf32, #tpu.memory_space<vmem>>, vector<1x16x32xf32>
    %21 = vector.shape_cast %20 : vector<1x16x32xf32> to vector<16x32xf32>
    %cst_22 = arith.constant dense<0.000000e+00> : vector<16x32xf32>
    %22 = tpu.matmul %6, %17, %cst_22 {dimension_numbers = #tpu.dot_dimension_numbers<[1], [0], [0], [1], [0, 0, 1, 1], [], []>} : vector<16x16xf32>, vector<16x32xf32>, vector<16x32xf32> -> vector<16x32xf32>
    %cst_23 = arith.constant dense<0.000000e+00> : vector<16x32xf32>
    %23 = tpu.matmul %6, %19, %cst_23 {dimension_numbers = #tpu.dot_dimension_numbers<[1], [0], [0], [1], [0, 0, 1, 1], [], []>} : vector<16x16xf32>, vector<16x32xf32>, vector<16x32xf32> -> vector<16x32xf32>
    %cst_24 = arith.constant dense<0.000000e+00> : vector<16x32xf32>
    %24 = tpu.matmul %6, %21, %cst_24 {dimension_numbers = #tpu.dot_dimension_numbers<[1], [0], [0], [1], [0, 0, 1, 1], [], []>} : vector<16x16xf32>, vector<16x32xf32>, vector<16x32xf32> -> vector<16x32xf32>
    %c0_25 = arith.constant 0 : index
    %c0_26 = arith.constant 0 : index
    %25 = vector.load %arg9[%c0_25, %c0_26] : memref<32x32xf32, #tpu.memory_space<vmem>>, vector<32x32xf32>
    %cst_27 = arith.constant dense<0.000000e+00> : vector<16x32xf32>
    %26 = tpu.matmul %22, %25, %cst_27 {dimension_numbers = #tpu.dot_dimension_numbers<[1], [0], [0], [1], [0, 0, 1, 1], [], []>} : vector<16x32xf32>, vector<32x32xf32>, vector<16x32xf32> -> vector<16x32xf32>
    %c0_28 = arith.constant 0 : index
    %c0_29 = arith.constant 0 : index
    %27 = vector.load %arg10[%c0_28, %c0_29] : memref<32x32xf32, #tpu.memory_space<vmem>>, vector<32x32xf32>
    %cst_30 = arith.constant dense<0.000000e+00> : vector<16x32xf32>
    %28 = tpu.matmul %24, %27, %cst_30 {dimension_numbers = #tpu.dot_dimension_numbers<[1], [0], [0], [1], [0, 0, 1, 1], [], []>} : vector<16x32xf32>, vector<32x32xf32>, vector<16x32xf32> -> vector<16x32xf32>
    %29 = arith.addf %26, %28 : vector<16x32xf32>
    %c0_31 = arith.constant 0 : index
    %c0_32 = arith.constant 0 : index
    %30 = vector.load %arg11[%c0_31, %c0_32] : memref<1x32xf32, #tpu.memory_space<vmem>>, vector<1x32xf32>
    %31 = vector.broadcast %30 : vector<1x32xf32> to vector<16x32xf32>
    %32 = arith.addf %29, %31 : vector<16x32xf32>
    %cst_33 = arith.constant 0.000000e+00 : f32
    %33 = vector.broadcast %cst_33 : f32 to vector<16x32xf32>
    %34 = arith.maximumf %32, %33 : vector<16x32xf32>
    %cst_34 = arith.constant dense<0.000000e+00> : vector<16x32xf32>
    %35 = tpu.matmul %6, %34, %cst_34 {dimension_numbers = #tpu.dot_dimension_numbers<[1], [0], [0], [1], [0, 0, 1, 1], [], []>} : vector<16x16xf32>, vector<16x32xf32>, vector<16x32xf32> -> vector<16x32xf32>
    %c0_35 = arith.constant 0 : index
    %c0_36 = arith.constant 0 : index
    %36 = vector.load %arg12[%c0_35, %c0_36] : memref<32x32xf32, #tpu.memory_space<vmem>>, vector<32x32xf32>
    %cst_37 = arith.constant dense<0.000000e+00> : vector<16x32xf32>
    %37 = tpu.matmul %35, %36, %cst_37 {dimension_numbers = #tpu.dot_dimension_numbers<[1], [0], [0], [1], [0, 0, 1, 1], [], []>} : vector<16x32xf32>, vector<32x32xf32>, vector<16x32xf32> -> vector<16x32xf32>
    %c0_38 = arith.constant 0 : index
    %c0_39 = arith.constant 0 : index
    %38 = vector.load %arg13[%c0_38, %c0_39] : memref<1x32xf32, #tpu.memory_space<vmem>>, vector<1x32xf32>
    %39 = vector.broadcast %38 : vector<1x32xf32> to vector<16x32xf32>
    %40 = arith.addf %37, %39 : vector<16x32xf32>
    %cst_40 = arith.constant 0.000000e+00 : f32
    %41 = vector.broadcast %cst_40 : f32 to vector<16x32xf32>
    %42 = arith.maximumf %40, %41 : vector<16x32xf32>
    %43 = vector.extract_strided_slice %42 {offsets = [0, 0], sizes = [16, 16], strides = [1, 1]} : vector<16x32xf32> to vector<16x16xf32>
    %44 = vector.extract_strided_slice %42 {offsets = [0, 16], sizes = [16, 16], strides = [1, 1]} : vector<16x32xf32> to vector<16x16xf32>
    %cst_41 = arith.constant 0.000000e+00 : f32
    %45 = vector.broadcast %cst_41 : f32 to vector<16x16xf32>
    %46 = arith.maximumf %44, %45 : vector<16x16xf32>
    %47 = math.absf %44 : vector<16x16xf32>
    %cst_42 = arith.constant 0.000000e+00 : f32
    %48 = vector.broadcast %cst_42 : f32 to vector<16x16xf32>
    %49 = arith.subf %48, %47 : vector<16x16xf32>
    %50 = math.exp %49 : vector<16x16xf32>
    %cst_43 = arith.constant 1.000000e+00 : f32
    %51 = vector.broadcast %cst_43 : f32 to vector<16x16xf32>
    %52 = arith.addf %51, %50 : vector<16x16xf32>
    %53 = math.log %52 : vector<16x16xf32>
    %54 = arith.addf %46, %53 : vector<16x16xf32>
    %c0_44 = arith.constant 0 : index
    %c0_45 = arith.constant 0 : index
    %55 = vector.load %arg14[%c0_44, %c0_45] : memref<32x32xf32, #tpu.memory_space<vmem>>, vector<32x32xf32>
    %cst_46 = arith.constant dense<0.000000e+00> : vector<16x32xf32>
    %56 = tpu.matmul %21, %55, %cst_46 {dimension_numbers = #tpu.dot_dimension_numbers<[1], [0], [0], [1], [0, 0, 1, 1], [], []>} : vector<16x32xf32>, vector<32x32xf32>, vector<16x32xf32> -> vector<16x32xf32>
    %c0_47 = arith.constant 0 : index
    %c0_48 = arith.constant 0 : index
    %57 = vector.load %arg15[%c0_47, %c0_48] : memref<1x32xf32, #tpu.memory_space<vmem>>, vector<1x32xf32>
    %58 = vector.broadcast %57 : vector<1x32xf32> to vector<16x32xf32>
    %59 = arith.addf %56, %58 : vector<16x32xf32>
    %cst_49 = arith.constant 0.000000e+00 : f32
    %60 = vector.broadcast %cst_49 : f32 to vector<16x32xf32>
    %61 = arith.maximumf %59, %60 : vector<16x32xf32>
    %c0_50 = arith.constant 0 : index
    %c0_51 = arith.constant 0 : index
    %62 = vector.load %arg16[%c0_50, %c0_51] : memref<32x32xf32, #tpu.memory_space<vmem>>, vector<32x32xf32>
    %cst_52 = arith.constant dense<0.000000e+00> : vector<16x32xf32>
    %63 = tpu.matmul %61, %62, %cst_52 {dimension_numbers = #tpu.dot_dimension_numbers<[1], [0], [0], [1], [0, 0, 1, 1], [], []>} : vector<16x32xf32>, vector<32x32xf32>, vector<16x32xf32> -> vector<16x32xf32>
    %c0_53 = arith.constant 0 : index
    %c0_54 = arith.constant 0 : index
    %64 = vector.load %arg17[%c0_53, %c0_54] : memref<1x32xf32, #tpu.memory_space<vmem>>, vector<1x32xf32>
    %65 = vector.broadcast %64 : vector<1x32xf32> to vector<16x32xf32>
    %66 = arith.addf %63, %65 : vector<16x32xf32>
    %67 = vector.extract_strided_slice %66 {offsets = [0, 0], sizes = [16, 16], strides = [1, 1]} : vector<16x32xf32> to vector<16x16xf32>
    %68 = vector.extract_strided_slice %66 {offsets = [0, 16], sizes = [16, 16], strides = [1, 1]} : vector<16x32xf32> to vector<16x16xf32>
    %cst_55 = arith.constant 0.000000e+00 : f32
    %69 = vector.broadcast %cst_55 : f32 to vector<16x16xf32>
    %70 = arith.maximumf %68, %69 : vector<16x16xf32>
    %71 = math.absf %68 : vector<16x16xf32>
    %cst_56 = arith.constant 0.000000e+00 : f32
    %72 = vector.broadcast %cst_56 : f32 to vector<16x16xf32>
    %73 = arith.subf %72, %71 : vector<16x16xf32>
    %74 = math.exp %73 : vector<16x16xf32>
    %cst_57 = arith.constant 1.000000e+00 : f32
    %75 = vector.broadcast %cst_57 : f32 to vector<16x16xf32>
    %76 = arith.addf %75, %74 : vector<16x16xf32>
    %77 = math.log %76 : vector<16x16xf32>
    %78 = arith.addf %70, %77 : vector<16x16xf32>
    %79 = arith.mulf %10, %54 : vector<16x16xf32>
    %80 = arith.addf %79, %43 : vector<16x16xf32>
    %c0_58 = arith.constant 0 : index
    %c0_59 = arith.constant 0 : index
    %81 = vector.load %arg7[%c0_58, %c0_59] : memref<16x32xf32, #tpu.memory_space<vmem>>, vector<16x32xf32>
    %cst_60 = arith.constant dense<0.000000e+00> : vector<16x32xf32>
    %82 = tpu.matmul %80, %81, %cst_60 {dimension_numbers = #tpu.dot_dimension_numbers<[1], [0], [0], [1], [0, 0, 1, 1], [], []>} : vector<16x16xf32>, vector<16x32xf32>, vector<16x32xf32> -> vector<16x32xf32>
    %c0_61 = arith.constant 0 : index
    %c0_62 = arith.constant 0 : index
    %83 = vector.load %arg8[%c0_61, %c0_62] : memref<1x32xf32, #tpu.memory_space<vmem>>, vector<1x32xf32>
    %84 = vector.broadcast %83 : vector<1x32xf32> to vector<16x32xf32>
    %85 = arith.addf %82, %84 : vector<16x32xf32>
    %cst_63 = arith.constant 0.000000e+00 : f32
    %86 = vector.broadcast %cst_63 : f32 to vector<16x32xf32>
    %87 = arith.maximumf %85, %86 : vector<16x32xf32>
    %cst_64 = arith.constant dense<0.000000e+00> : vector<16x16xf32>
    %88 = tpu.matmul %80, %80, %cst_64 {dimension_numbers = #tpu.dot_dimension_numbers<[1], [1], [0], [0], [0, 0, 1, 0], [], []>} : vector<16x16xf32>, vector<16x16xf32>, vector<16x16xf32> -> vector<16x16xf32>
    %cst_65 = arith.constant 0.000000e+00 : f32
    %89 = vector.broadcast %cst_65 : f32 to vector<16x16xf32>
    %90 = arith.subf %89, %88 : vector<16x16xf32>
    %91 = math.exp %90 : vector<16x16xf32>
    %cst_66 = arith.constant 1.000000e+00 : f32
    %92 = vector.broadcast %cst_66 : f32 to vector<16x16xf32>
    %93 = arith.addf %92, %91 : vector<16x16xf32>
    %94 = tpu.reciprocal %93 {approx = true} : vector<16x16xf32> -> vector<16x16xf32>
    %cst_67 = arith.constant dense<0.000000e+00> : vector<16xf32>
    %95 = vector.multi_reduction <add>, %8, %cst_67 [1] : vector<16x16xf32> to vector<16xf32>
    %96 = vector.shape_cast %95 : vector<16xf32> to vector<16x1xf32>
    %cst_68 = arith.constant dense<0.000000e+00> : vector<1xf32>
    %97 = vector.multi_reduction <add>, %96, %cst_68 [0] : vector<16x1xf32> to vector<1xf32>
    %98 = vector.shape_cast %97 : vector<1xf32> to vector<1x1xf32>
    %cst_69 = arith.constant 2.560000e+02 : f32
    %99 = vector.broadcast %cst_69 : f32 to vector<1x1xf32>
    %100 = arith.subf %99, %98 : vector<1x1xf32>
    %101 = arith.divf %100, %98 : vector<1x1xf32>
    %cst_70 = arith.constant 2.560000e+02 : f32
    %102 = vector.broadcast %cst_70 : f32 to vector<1x1xf32>
    %103 = arith.subf %102, %98 : vector<1x1xf32>
    %cst_71 = arith.constant 2.000000e+00 : f32
    %104 = vector.broadcast %cst_71 : f32 to vector<1x1xf32>
    %105 = arith.mulf %103, %104 : vector<1x1xf32>
    %cst_72 = arith.constant 2.560000e+02 : f32
    %106 = vector.broadcast %cst_72 : f32 to vector<1x1xf32>
    %107 = arith.divf %106, %105 : vector<1x1xf32>
    %cst_73 = arith.constant 1.000000e+00 : f32
    %108 = vector.broadcast %cst_73 : f32 to vector<1x1xf32>
    %109 = arith.subf %101, %108 : vector<1x1xf32>
    %110 = vector.broadcast %109 : vector<1x1xf32> to vector<16x16xf32>
    %111 = arith.mulf %110, %8 : vector<16x16xf32>
    %cst_74 = arith.constant 1.000000e+00 : f32
    %112 = vector.broadcast %cst_74 : f32 to vector<16x16xf32>
    %113 = arith.addf %112, %111 : vector<16x16xf32>
    %cst_75 = arith.constant 1.000000e+00 : f32
    %114 = vector.broadcast %cst_75 : f32 to vector<16x16xf32>
    %115 = arith.subf %114, %8 : vector<16x16xf32>
    %116 = arith.mulf %115, %94 : vector<16x16xf32>
    %117 = math.absf %94 : vector<16x16xf32>
    %cst_76 = arith.constant 0.000000e+00 : f32
    %118 = vector.broadcast %cst_76 : f32 to vector<16x16xf32>
    %119 = arith.subf %118, %117 : vector<16x16xf32>
    %120 = math.exp %119 : vector<16x16xf32>
    %cst_77 = arith.constant 1.000000e+00 : f32
    %121 = vector.broadcast %cst_77 : f32 to vector<16x16xf32>
    %122 = arith.addf %121, %120 : vector<16x16xf32>
    %123 = math.log %122 : vector<16x16xf32>
    %cst_78 = arith.constant 0.000000e+00 : f32
    %124 = vector.broadcast %cst_78 : f32 to vector<16x16xf32>
    %125 = arith.subf %124, %94 : vector<16x16xf32>
    %cst_79 = arith.constant 0.000000e+00 : f32
    %126 = vector.broadcast %cst_79 : f32 to vector<16x16xf32>
    %127 = arith.maximumf %125, %126 : vector<16x16xf32>
    %128 = arith.addf %123, %127 : vector<16x16xf32>
    %129 = arith.mulf %113, %128 : vector<16x16xf32>
    %130 = arith.addf %116, %129 : vector<16x16xf32>
    %cst_80 = arith.constant dense<0.000000e+00> : vector<16xf32>
    %131 = vector.multi_reduction <add>, %130, %cst_80 [1] : vector<16x16xf32> to vector<16xf32>
    %132 = vector.shape_cast %131 : vector<16xf32> to vector<16x1xf32>
    %cst_81 = arith.constant dense<0.000000e+00> : vector<1xf32>
    %133 = vector.multi_reduction <add>, %132, %cst_81 [0] : vector<16x1xf32> to vector<1xf32>
    %134 = vector.shape_cast %133 : vector<1xf32> to vector<1x1xf32>
    %cst_82 = arith.constant 2.560000e+02 : f32
    %135 = vector.broadcast %cst_82 : f32 to vector<1x1xf32>
    %136 = arith.divf %134, %135 : vector<1x1xf32>
    %137 = arith.mulf %107, %136 : vector<1x1xf32>
    %cst_83 = arith.constant 1.000000e-10 : f32
    %138 = vector.broadcast %cst_83 : f32 to vector<16x16xf32>
    %139 = arith.addf %54, %138 : vector<16x16xf32>
    %cst_84 = arith.constant 1.000000e-10 : f32
    %140 = vector.broadcast %cst_84 : f32 to vector<16x16xf32>
    %141 = arith.addf %78, %140 : vector<16x16xf32>
    %142 = arith.subf %43, %67 : vector<16x16xf32>
    %143 = math.log %141 : vector<16x16xf32>
    %cst_85 = arith.constant 2.000000e+00 : f32
    %144 = vector.broadcast %cst_85 : f32 to vector<16x16xf32>
    %145 = arith.mulf %144, %143 : vector<16x16xf32>
    %146 = math.log %139 : vector<16x16xf32>
    %cst_86 = arith.constant 2.000000e+00 : f32
    %147 = vector.broadcast %cst_86 : f32 to vector<16x16xf32>
    %148 = arith.mulf %147, %146 : vector<16x16xf32>
    %149 = arith.subf %145, %148 : vector<16x16xf32>
    %150 = arith.mulf %139, %139 : vector<16x16xf32>
    %151 = arith.mulf %142, %142 : vector<16x16xf32>
    %152 = arith.addf %150, %151 : vector<16x16xf32>
    %153 = arith.mulf %141, %141 : vector<16x16xf32>
    %154 = arith.divf %152, %153 : vector<16x16xf32>
    %155 = arith.addf %149, %154 : vector<16x16xf32>
    %cst_87 = arith.constant 1.000000e+00 : f32
    %156 = vector.broadcast %cst_87 : f32 to vector<16x16xf32>
    %157 = arith.subf %155, %156 : vector<16x16xf32>
    %cst_88 = arith.constant dense<0.000000e+00> : vector<16xf32>
    %158 = vector.multi_reduction <add>, %157, %cst_88 [1] : vector<16x16xf32> to vector<16xf32>
    %159 = vector.shape_cast %158 : vector<16xf32> to vector<16x1xf32>
    %cst_89 = arith.constant dense<0.000000e+00> : vector<1xf32>
    %160 = vector.multi_reduction <add>, %159, %cst_89 [0] : vector<16x1xf32> to vector<1xf32>
    %161 = vector.shape_cast %160 : vector<1xf32> to vector<1x1xf32>
    %cst_90 = arith.constant 5.000000e-01 : f32
    %162 = vector.broadcast %cst_90 : f32 to vector<1x1xf32>
    %163 = arith.mulf %162, %161 : vector<1x1xf32>
    %cst_91 = arith.constant 2.560000e+02 : f32
    %164 = vector.broadcast %cst_91 : f32 to vector<1x1xf32>
    %165 = arith.divf %163, %164 : vector<1x1xf32>
    %c0_92 = arith.constant 0 : index
    %c0_93 = arith.constant 0 : index
    %166 = vector.load %arg28[%c0_92, %c0_93] : memref<1x1xf32, #tpu.memory_space<vmem>>, vector<1x1xf32>
    %167 = arith.addf %166, %165 : vector<1x1xf32>
    %c0_94 = arith.constant 0 : index
    %c0_95 = arith.constant 0 : index
    %168 = vector.load %arg28[%c0_94, %c0_95] : memref<1x1xf32, #tpu.memory_space<vmem>>, vector<1x1xf32>
    tpu.vector_store %arg28[%c0_94, %c0_95], %167 {strides = array<i32>} : memref<1x1xf32, #tpu.memory_space<vmem>>, vector<1x1xf32>,
    %c0_96 = arith.constant 0 : index
    %c0_97 = arith.constant 0 : index
    %169 = vector.load %arg29[%c0_96, %c0_97] : memref<1x1xf32, #tpu.memory_space<vmem>>, vector<1x1xf32>
    %170 = arith.addf %169, %137 : vector<1x1xf32>
    %c0_98 = arith.constant 0 : index
    %c0_99 = arith.constant 0 : index
    %171 = vector.load %arg29[%c0_98, %c0_99] : memref<1x1xf32, #tpu.memory_space<vmem>>, vector<1x1xf32>
    tpu.vector_store %arg29[%c0_98, %c0_99], %170 {strides = array<i32>} : memref<1x1xf32, #tpu.memory_space<vmem>>, vector<1x1xf32>,
    %cst_100 = arith.constant dense<0.000000e+00> : vector<16x32xf32>
    %172 = tpu.matmul %6, %87, %cst_100 {dimension_numbers = #tpu.dot_dimension_numbers<[1], [0], [0], [1], [0, 0, 1, 1], [], []>} : vector<16x16xf32>, vector<16x32xf32>, vector<16x32xf32> -> vector<16x32xf32>
    %c0_101 = arith.constant 0 : index
    %c0_102 = arith.constant 0 : index
    %173 = vector.load %arg18[%c0_101, %c0_102] : memref<32x96xf32, #tpu.memory_space<vmem>>, vector<32x96xf32>
    %cst_103 = arith.constant dense<0.000000e+00> : vector<16x96xf32>
    %174 = tpu.matmul %22, %173, %cst_103 {dimension_numbers = #tpu.dot_dimension_numbers<[1], [0], [0], [1], [0, 0, 1, 1], [], []>} : vector<16x32xf32>, vector<32x96xf32>, vector<16x96xf32> -> vector<16x96xf32>
    %c0_104 = arith.constant 0 : index
    %c0_105 = arith.constant 0 : index
    %175 = vector.load %arg19[%c0_104, %c0_105] : memref<32x96xf32, #tpu.memory_space<vmem>>, vector<32x96xf32>
    %cst_106 = arith.constant dense<0.000000e+00> : vector<16x96xf32>
    %176 = tpu.matmul %172, %175, %cst_106 {dimension_numbers = #tpu.dot_dimension_numbers<[1], [0], [0], [1], [0, 0, 1, 1], [], []>} : vector<16x32xf32>, vector<32x96xf32>, vector<16x96xf32> -> vector<16x96xf32>
    %177 = arith.addf %174, %176 : vector<16x96xf32>
    %c0_107 = arith.constant 0 : index
    %c0_108 = arith.constant 0 : index
    %178 = vector.load %arg20[%c0_107, %c0_108] : memref<32x64xf32, #tpu.memory_space<vmem>>, vector<32x64xf32>
    %cst_109 = arith.constant dense<0.000000e+00> : vector<16x64xf32>
    %179 = tpu.matmul %23, %178, %cst_109 {dimension_numbers = #tpu.dot_dimension_numbers<[1], [0], [0], [1], [0, 0, 1, 1], [], []>} : vector<16x32xf32>, vector<32x64xf32>, vector<16x64xf32> -> vector<16x64xf32>
    %180 = vector.extract_strided_slice %177 {offsets = [0, 0], sizes = [16, 32], strides = [1, 1]} : vector<16x96xf32> to vector<16x32xf32>
    %181 = vector.extract_strided_slice %179 {offsets = [0, 0], sizes = [16, 32], strides = [1, 1]} : vector<16x64xf32> to vector<16x32xf32>
    %182 = arith.addf %180, %181 : vector<16x32xf32>
    %cst_110 = arith.constant 0.000000e+00 : f32
    %183 = vector.broadcast %cst_110 : f32 to vector<16x32xf32>
    %184 = arith.subf %183, %182 : vector<16x32xf32>
    %185 = math.exp %184 : vector<16x32xf32>
    %cst_111 = arith.constant 1.000000e+00 : f32
    %186 = vector.broadcast %cst_111 : f32 to vector<16x32xf32>
    %187 = arith.addf %186, %185 : vector<16x32xf32>
    %188 = tpu.reciprocal %187 {approx = true} : vector<16x32xf32> -> vector<16x32xf32>
    %189 = vector.extract_strided_slice %177 {offsets = [0, 32], sizes = [16, 32], strides = [1, 1]} : vector<16x96xf32> to vector<16x32xf32>
    %190 = vector.extract_strided_slice %179 {offsets = [0, 32], sizes = [16, 32], strides = [1, 1]} : vector<16x64xf32> to vector<16x32xf32>
    %191 = arith.addf %189, %190 : vector<16x32xf32>
    %cst_112 = arith.constant 0.000000e+00 : f32
    %192 = vector.broadcast %cst_112 : f32 to vector<16x32xf32>
    %193 = arith.subf %192, %191 : vector<16x32xf32>
    %194 = math.exp %193 : vector<16x32xf32>
    %cst_113 = arith.constant 1.000000e+00 : f32
    %195 = vector.broadcast %cst_113 : f32 to vector<16x32xf32>
    %196 = arith.addf %195, %194 : vector<16x32xf32>
    %197 = tpu.reciprocal %196 {approx = true} : vector<16x32xf32> -> vector<16x32xf32>
    %198 = vector.extract_strided_slice %177 {offsets = [0, 64], sizes = [16, 32], strides = [1, 1]} : vector<16x96xf32> to vector<16x32xf32>
    %199 = arith.mulf %197, %19 : vector<16x32xf32>
    %cst_114 = arith.constant dense<0.000000e+00> : vector<16x32xf32>
    %200 = tpu.matmul %6, %199, %cst_114 {dimension_numbers = #tpu.dot_dimension_numbers<[1], [0], [0], [1], [0, 0, 1, 1], [], []>} : vector<16x16xf32>, vector<16x32xf32>, vector<16x32xf32> -> vector<16x32xf32>
    %c0_115 = arith.constant 0 : index
    %c0_116 = arith.constant 0 : index
    %201 = vector.load %arg21[%c0_115, %c0_116] : memref<32x32xf32, #tpu.memory_space<vmem>>, vector<32x32xf32>
    %cst_117 = arith.constant dense<0.000000e+00> : vector<16x32xf32>
    %202 = tpu.matmul %200, %201, %cst_117 {dimension_numbers = #tpu.dot_dimension_numbers<[1], [0], [0], [1], [0, 0, 1, 1], [], []>} : vector<16x32xf32>, vector<32x32xf32>, vector<16x32xf32> -> vector<16x32xf32>
    %203 = arith.addf %198, %202 : vector<16x32xf32>
    %204 = math.tanh %203 : vector<16x32xf32>
    %205 = arith.mulf %188, %19 : vector<16x32xf32>
    %cst_118 = arith.constant 1.000000e+00 : f32
    %206 = vector.broadcast %cst_118 : f32 to vector<16x32xf32>
    %207 = arith.subf %206, %188 : vector<16x32xf32>
    %208 = arith.mulf %207, %204 : vector<16x32xf32>
    %209 = arith.addf %205, %208 : vector<16x32xf32>
    %cst_119 = arith.constant dense<0.000000e+00> : vector<16x32xf32>
    %210 = tpu.matmul %6, %209, %cst_119 {dimension_numbers = #tpu.dot_dimension_numbers<[1], [0], [0], [1], [0, 0, 1, 1], [], []>} : vector<16x16xf32>, vector<16x32xf32>, vector<16x32xf32> -> vector<16x32xf32>
    %c0_120 = arith.constant 0 : index
    %c0_121 = arith.constant 0 : index
    %211 = vector.load %arg22[%c0_120, %c0_121] : memref<32x96xf32, #tpu.memory_space<vmem>>, vector<32x96xf32>
    %cst_122 = arith.constant dense<0.000000e+00> : vector<16x96xf32>
    %212 = tpu.matmul %210, %211, %cst_122 {dimension_numbers = #tpu.dot_dimension_numbers<[1], [0], [0], [1], [0, 0, 1, 1], [], []>} : vector<16x32xf32>, vector<32x96xf32>, vector<16x96xf32> -> vector<16x96xf32>
    %c0_123 = arith.constant 0 : index
    %c0_124 = arith.constant 0 : index
    %213 = vector.load %arg23[%c0_123, %c0_124] : memref<32x64xf32, #tpu.memory_space<vmem>>, vector<32x64xf32>
    %cst_125 = arith.constant dense<0.000000e+00> : vector<16x64xf32>
    %214 = tpu.matmul %24, %213, %cst_125 {dimension_numbers = #tpu.dot_dimension_numbers<[1], [0], [0], [1], [0, 0, 1, 1], [], []>} : vector<16x32xf32>, vector<32x64xf32>, vector<16x64xf32> -> vector<16x64xf32>
    %215 = vector.extract_strided_slice %212 {offsets = [0, 0], sizes = [16, 32], strides = [1, 1]} : vector<16x96xf32> to vector<16x32xf32>
    %216 = vector.extract_strided_slice %214 {offsets = [0, 0], sizes = [16, 32], strides = [1, 1]} : vector<16x64xf32> to vector<16x32xf32>
    %217 = arith.addf %215, %216 : vector<16x32xf32>
    %cst_126 = arith.constant 0.000000e+00 : f32
    %218 = vector.broadcast %cst_126 : f32 to vector<16x32xf32>
    %219 = arith.subf %218, %217 : vector<16x32xf32>
    %220 = math.exp %219 : vector<16x32xf32>
    %cst_127 = arith.constant 1.000000e+00 : f32
    %221 = vector.broadcast %cst_127 : f32 to vector<16x32xf32>
    %222 = arith.addf %221, %220 : vector<16x32xf32>
    %223 = tpu.reciprocal %222 {approx = true} : vector<16x32xf32> -> vector<16x32xf32>
    %224 = vector.extract_strided_slice %212 {offsets = [0, 32], sizes = [16, 32], strides = [1, 1]} : vector<16x96xf32> to vector<16x32xf32>
    %225 = vector.extract_strided_slice %214 {offsets = [0, 32], sizes = [16, 32], strides = [1, 1]} : vector<16x64xf32> to vector<16x32xf32>
    %226 = arith.addf %224, %225 : vector<16x32xf32>
    %cst_128 = arith.constant 0.000000e+00 : f32
    %227 = vector.broadcast %cst_128 : f32 to vector<16x32xf32>
    %228 = arith.subf %227, %226 : vector<16x32xf32>
    %229 = math.exp %228 : vector<16x32xf32>
    %cst_129 = arith.constant 1.000000e+00 : f32
    %230 = vector.broadcast %cst_129 : f32 to vector<16x32xf32>
    %231 = arith.addf %230, %229 : vector<16x32xf32>
    %232 = tpu.reciprocal %231 {approx = true} : vector<16x32xf32> -> vector<16x32xf32>
    %233 = vector.extract_strided_slice %212 {offsets = [0, 64], sizes = [16, 32], strides = [1, 1]} : vector<16x96xf32> to vector<16x32xf32>
    %234 = arith.mulf %232, %21 : vector<16x32xf32>
    %cst_130 = arith.constant dense<0.000000e+00> : vector<16x32xf32>
    %235 = tpu.matmul %6, %234, %cst_130 {dimension_numbers = #tpu.dot_dimension_numbers<[1], [0], [0], [1], [0, 0, 1, 1], [], []>} : vector<16x16xf32>, vector<16x32xf32>, vector<16x32xf32> -> vector<16x32xf32>
    %c0_131 = arith.constant 0 : index
    %c0_132 = arith.constant 0 : index
    %236 = vector.load %arg24[%c0_131, %c0_132] : memref<32x32xf32, #tpu.memory_space<vmem>>, vector<32x32xf32>
    %cst_133 = arith.constant dense<0.000000e+00> : vector<16x32xf32>
    %237 = tpu.matmul %235, %236, %cst_133 {dimension_numbers = #tpu.dot_dimension_numbers<[1], [0], [0], [1], [0, 0, 1, 1], [], []>} : vector<16x32xf32>, vector<32x32xf32>, vector<16x32xf32> -> vector<16x32xf32>
    %238 = arith.addf %233, %237 : vector<16x32xf32>
    %239 = math.tanh %238 : vector<16x32xf32>
    %240 = arith.mulf %223, %21 : vector<16x32xf32>
    %cst_134 = arith.constant 1.000000e+00 : f32
    %241 = vector.broadcast %cst_134 : f32 to vector<16x32xf32>
    %242 = arith.subf %241, %223 : vector<16x32xf32>
    %243 = arith.mulf %242, %239 : vector<16x32xf32>
    %244 = arith.addf %240, %243 : vector<16x32xf32>
    %c0_135 = arith.constant 0 : index
    %c0_136 = arith.constant 0 : index
    %c0_137 = arith.constant 0 : index
    %245 = vector.load %arg27[%c0_135, %c0_136, %c0_137] : memref<2x16x32xf32, #tpu.memory_space<vmem>>, vector<1x16x32xf32>
    %246 = vector.shape_cast %245 : vector<1x16x32xf32> to vector<16x32xf32>
    %247 = vector.shape_cast %209 : vector<16x32xf32> to vector<1x16x32xf32>
    tpu.vector_store %arg27[%c0_135, %c0_136, %c0_137], %247 {strides = array<i32>} : memref<2x16x32xf32, #tpu.memory_space<vmem>>, vector<1x16x32xf32>,
    %c1_138 = arith.constant 1 : index
    %c0_139 = arith.constant 0 : index
    %c0_140 = arith.constant 0 : index
    %248 = vector.load %arg27[%c1_138, %c0_139, %c0_140] : memref<2x16x32xf32, #tpu.memory_space<vmem>>, vector<1x16x32xf32>
    %249 = vector.shape_cast %248 : vector<1x16x32xf32> to vector<16x32xf32>
    %250 = vector.shape_cast %244 : vector<16x32xf32> to vector<1x16x32xf32>
    tpu.vector_store %arg27[%c1_138, %c0_139, %c0_140], %250 {strides = array<i32>} : memref<2x16x32xf32, #tpu.memory_space<vmem>>, vector<1x16x32xf32>,
    %c0_141 = arith.constant 0 : index
    %c0_142 = arith.constant 0 : index
    %c0_143 = arith.constant 0 : index
    %251 = vector.load %arg25[%c0_141, %c0_142, %c0_143] : memref<1x16x16xf32, #tpu.memory_space<vmem>>, vector<1x16x16xf32>
    %252 = vector.shape_cast %251 : vector<1x16x16xf32> to vector<16x16xf32>
    %253 = vector.shape_cast %43 : vector<16x16xf32> to vector<1x16x16xf32>
    tpu.vector_store %arg25[%c0_141, %c0_142, %c0_143], %253 {strides = array<i32>} : memref<1x16x16xf32, #tpu.memory_space<vmem>>, vector<1x16x16xf32>,
    %c0_144 = arith.constant 0 : index
    %c0_145 = arith.constant 0 : index
    %c0_146 = arith.constant 0 : index
    %254 = vector.load %arg26[%c0_144, %c0_145, %c0_146] : memref<1x16x16xf32, #tpu.memory_space<vmem>>, vector<1x16x16xf32>
    %255 = vector.shape_cast %254 : vector<1x16x16xf32> to vector<16x16xf32>
    %256 = vector.shape_cast %67 : vector<16x16xf32> to vector<1x16x16xf32>
    tpu.vector_store %arg26[%c0_144, %c0_145, %c0_146], %256 {strides = array<i32>} : memref<1x16x16xf32, #tpu.memory_space<vmem>>, vector<1x16x16xf32>,
    return
  }
  func.func @transform_0(%arg0: i32) -> (i32, i32, i32) {
    %c0_i32 = arith.constant 0 : i32
    %c0_i32_0 = arith.constant 0 : i32
    %c0_i32_1 = arith.constant 0 : i32
    return %arg0, %c0_i32, %c0_i32_0 : i32, i32, i32
  }
  func.func @transform_1(%arg0: i32) -> (i32, i32, i32) {
    %c0_i32 = arith.constant 0 : i32
    %c0_i32_0 = arith.constant 0 : i32
    %c0_i32_1 = arith.constant 0 : i32
    return %arg0, %c0_i32, %c0_i32_0 : i32, i32, i32
  }
  func.func @transform_2(%arg0: i32) -> (i32, i32, i32) {
    %c0_i32 = arith.constant 0 : i32
    %c0_i32_0 = arith.constant 0 : i32
    %c0_i32_1 = arith.constant 0 : i32
    return %arg0, %c0_i32, %c0_i32_0 : i32, i32, i32
  }
  func.func @transform_3(%arg0: i32) -> (i32, i32, i32) {
    %c0_i32 = arith.constant 0 : i32
    %c0_i32_0 = arith.constant 0 : i32
    %c0_i32_1 = arith.constant 0 : i32
    return %arg0, %c0_i32, %c0_i32_0 : i32, i32, i32
  }
  func.func @transform_4(%arg0: i32) -> (i32, i32) {
    %c0_i32 = arith.constant 0 : i32
    %c0_i32_0 = arith.constant 0 : i32
    %c0_i32_1 = arith.constant 0 : i32
    return %c0_i32, %c0_i32_0 : i32, i32
  }
  func.func @transform_5(%arg0: i32) -> (i32, i32) {
    %c0_i32 = arith.constant 0 : i32
    %c0_i32_0 = arith.constant 0 : i32
    %c0_i32_1 = arith.constant 0 : i32
    return %c0_i32, %c0_i32_0 : i32, i32
  }
  func.func @transform_6(%arg0: i32) -> (i32, i32) {
    %c0_i32 = arith.constant 0 : i32
    %c0_i32_0 = arith.constant 0 : i32
    %c0_i32_1 = arith.constant 0 : i32
    return %c0_i32, %c0_i32_0 : i32, i32
  }
  func.func @transform_7(%arg0: i32) -> (i32, i32) {
    %c0_i32 = arith.constant 0 : i32
    %c0_i32_0 = arith.constant 0 : i32
    %c0_i32_1 = arith.constant 0 : i32
    return %c0_i32, %c0_i32_0 : i32, i32
  }
  func.func @transform_8(%arg0: i32) -> (i32, i32) {
    %c0_i32 = arith.constant 0 : i32
    %c0_i32_0 = arith.constant 0 : i32
    %c0_i32_1 = arith.constant 0 : i32
    return %c0_i32, %c0_i32_0 : i32, i32
  }
  func.func @transform_9(%arg0: i32) -> (i32, i32) {
    %c0_i32 = arith.constant 0 : i32
    %c0_i32_0 = arith.constant 0 : i32
    %c0_i32_1 = arith.constant 0 : i32
    return %c0_i32, %c0_i32_0 : i32, i32
  }
  func.func @transform_10(%arg0: i32) -> (i32, i32) {
    %c0_i32 = arith.constant 0 : i32
    %c0_i32_0 = arith.constant 0 : i32
    %c0_i32_1 = arith.constant 0 : i32
    return %c0_i32, %c0_i32_0 : i32, i32
  }
  func.func @transform_11(%arg0: i32) -> (i32, i32) {
    %c0_i32 = arith.constant 0 : i32
    %c0_i32_0 = arith.constant 0 : i32
    %c0_i32_1 = arith.constant 0 : i32
    return %c0_i32, %c0_i32_0 : i32, i32
  }
  func.func @transform_12(%arg0: i32) -> (i32, i32) {
    %c0_i32 = arith.constant 0 : i32
    %c0_i32_0 = arith.constant 0 : i32
    %c0_i32_1 = arith.constant 0 : i32
    return %c0_i32, %c0_i32_0 : i32, i32
  }
  func.func @transform_13(%arg0: i32) -> (i32, i32) {
    %c0_i32 = arith.constant 0 : i32
    %c0_i32_0 = arith.constant 0 : i32
    %c0_i32_1 = arith.constant 0 : i32
    return %c0_i32, %c0_i32_0 : i32, i32
  }
  func.func @transform_14(%arg0: i32) -> (i32, i32) {
    %c0_i32 = arith.constant 0 : i32
    %c0_i32_0 = arith.constant 0 : i32
    %c0_i32_1 = arith.constant 0 : i32
    return %c0_i32, %c0_i32_0 : i32, i32
  }
  func.func @transform_15(%arg0: i32) -> (i32, i32) {
    %c0_i32 = arith.constant 0 : i32
    %c0_i32_0 = arith.constant 0 : i32
    %c0_i32_1 = arith.constant 0 : i32
    return %c0_i32, %c0_i32_0 : i32, i32
  }
  func.func @transform_16(%arg0: i32) -> (i32, i32) {
    %c0_i32 = arith.constant 0 : i32
    %c0_i32_0 = arith.constant 0 : i32
    %c0_i32_1 = arith.constant 0 : i32
    return %c0_i32, %c0_i32_0 : i32, i32
  }
  func.func @transform_17(%arg0: i32) -> (i32, i32) {
    %c0_i32 = arith.constant 0 : i32
    %c0_i32_0 = arith.constant 0 : i32
    %c0_i32_1 = arith.constant 0 : i32
    return %c0_i32, %c0_i32_0 : i32, i32
  }
  func.func @transform_18(%arg0: i32) -> (i32, i32) {
    %c0_i32 = arith.constant 0 : i32
    %c0_i32_0 = arith.constant 0 : i32
    %c0_i32_1 = arith.constant 0 : i32
    return %c0_i32, %c0_i32_0 : i32, i32
  }
  func.func @transform_19(%arg0: i32) -> (i32, i32) {
    %c0_i32 = arith.constant 0 : i32
    %c0_i32_0 = arith.constant 0 : i32
    %c0_i32_1 = arith.constant 0 : i32
    return %c0_i32, %c0_i32_0 : i32, i32
  }
  func.func @transform_20(%arg0: i32) -> (i32, i32) {
    %c0_i32 = arith.constant 0 : i32
    %c0_i32_0 = arith.constant 0 : i32
    %c0_i32_1 = arith.constant 0 : i32
    return %c0_i32, %c0_i32_0 : i32, i32
  }
  func.func @transform_21(%arg0: i32) -> (i32, i32) {
    %c0_i32 = arith.constant 0 : i32
    %c0_i32_0 = arith.constant 0 : i32
    %c0_i32_1 = arith.constant 0 : i32
    return %c0_i32, %c0_i32_0 : i32, i32
  }
  func.func @transform_22(%arg0: i32) -> (i32, i32) {
    %c0_i32 = arith.constant 0 : i32
    %c0_i32_0 = arith.constant 0 : i32
    %c0_i32_1 = arith.constant 0 : i32
    return %c0_i32, %c0_i32_0 : i32, i32
  }
  func.func @transform_23(%arg0: i32) -> (i32, i32) {
    %c0_i32 = arith.constant 0 : i32
    %c0_i32_0 = arith.constant 0 : i32
    %c0_i32_1 = arith.constant 0 : i32
    return %c0_i32, %c0_i32_0 : i32, i32
  }
  func.func @transform_24(%arg0: i32) -> (i32, i32, i32) {
    %c0_i32 = arith.constant 0 : i32
    %c0_i32_0 = arith.constant 0 : i32
    %c0_i32_1 = arith.constant 0 : i32
    return %arg0, %c0_i32, %c0_i32_0 : i32, i32, i32
  }
  func.func @transform_25(%arg0: i32) -> (i32, i32, i32) {
    %c0_i32 = arith.constant 0 : i32
    %c0_i32_0 = arith.constant 0 : i32
    %c0_i32_1 = arith.constant 0 : i32
    return %arg0, %c0_i32, %c0_i32_0 : i32, i32, i32
  }
  func.func @transform_26(%arg0: i32) -> (i32, i32, i32) {
    %c0_i32 = arith.constant 0 : i32
    %c0_i32_0 = arith.constant 0 : i32
    %c0_i32_1 = arith.constant 0 : i32
    %c0_i32_2 = arith.constant 0 : i32
    return %c0_i32, %c0_i32_0, %c0_i32_1 : i32, i32, i32
  }
  func.func @transform_27(%arg0: i32) -> (i32, i32) {
    %c0_i32 = arith.constant 0 : i32
    %c0_i32_0 = arith.constant 0 : i32
    %c0_i32_1 = arith.constant 0 : i32
    return %c0_i32, %c0_i32_0 : i32, i32
  }
  func.func @transform_28(%arg0: i32) -> (i32, i32) {
    %c0_i32 = arith.constant 0 : i32
    %c0_i32_0 = arith.constant 0 : i32
    %c0_i32_1 = arith.constant 0 : i32
    return %c0_i32, %c0_i32_0 : i32, i32
  }
}

</mosaic_0001>

<llo_original>
// kernel: vgrnn_forward.1
$region0: #{vgrnn_forward.1}
  #allocation0 [shape = 'u32[]', space=smem, size = 0x4, offset = 0x4, fixed_abs, tag = 'smem constant byte address 0x4 - core index']
  #allocation1 [shape = 'u32[72,128]{1,0:T(1,128)}', space=vmem, size = 0x9000, scoped, tag = 'internal scratch']
  %s0 = inlined_call_operand.vmem [shape: f32[4,16,8], index: 0, kind: input, shape index: {}]
  %s1 = inlined_call_operand.vmem [shape: f32[4,16,16], index: 1, kind: input, shape index: {}]
  %s2 = inlined_call_operand.vmem [shape: f32[4,16,16], index: 2, kind: input, shape index: {}]
  %s3 = inlined_call_operand.vmem [shape: f32[4,16,16], index: 3, kind: input, shape index: {}]
  %s4 = inlined_call_operand.vmem [shape: f32[8,32], index: 4, kind: input, shape index: {}]
  %s5 = inlined_call_operand.vmem [shape: f32[1,32], index: 5, kind: input, shape index: {}]
  %s6 = inlined_call_operand.vmem [shape: f32[16,32], index: 6, kind: input, shape index: {}]
  %s7 = inlined_call_operand.vmem [shape: f32[1,32], index: 7, kind: input, shape index: {}]
  %s8 = inlined_call_operand.vmem [shape: f32[32,32], index: 8, kind: input, shape index: {}]
  %s9 = inlined_call_operand.vmem [shape: f32[32,32], index: 9, kind: input, shape index: {}]
  %s10 = inlined_call_operand.vmem [shape: f32[1,32], index: 10, kind: input, shape index: {}]
  %s11 = inlined_call_operand.vmem [shape: f32[32,32], index: 11, kind: input, shape index: {}]
  %s12 = inlined_call_operand.vmem [shape: f32[1,32], index: 12, kind: input, shape index: {}]
  %s13 = inlined_call_operand.vmem [shape: f32[32,32], index: 13, kind: input, shape index: {}]
  %s14 = inlined_call_operand.vmem [shape: f32[1,32], index: 14, kind: input, shape index: {}]
  %s15 = inlined_call_operand.vmem [shape: f32[32,32], index: 15, kind: input, shape index: {}]
  %s16 = inlined_call_operand.vmem [shape: f32[1,32], index: 16, kind: input, shape index: {}]
  %s17 = inlined_call_operand.vmem [shape: f32[32,96], index: 17, kind: input, shape index: {}]
  %s18 = inlined_call_operand.vmem [shape: f32[32,96], index: 18, kind: input, shape index: {}]
  %s19 = inlined_call_operand.vmem [shape: f32[32,64], index: 19, kind: input, shape index: {}]
  %s20 = inlined_call_operand.vmem [shape: f32[32,32], index: 20, kind: input, shape index: {}]
  %s21 = inlined_call_operand.vmem [shape: f32[32,96], index: 21, kind: input, shape index: {}]
  %s22 = inlined_call_operand.vmem [shape: f32[32,64], index: 22, kind: input, shape index: {}]
  %s23 = inlined_call_operand.vmem [shape: f32[32,32], index: 23, kind: input, shape index: {}]
  %s24 = inlined_call_operand.vmem [shape: f32[4,16,16], index: 24, kind: output, shape index: {0}]
  %s25 = inlined_call_operand.vmem [shape: f32[4,16,16], index: 25, kind: output, shape index: {1}]
  %s26 = inlined_call_operand.hbm [shape: f32[2,16,32], index: 26, kind: output, shape index: {2}]
  %s27 = inlined_call_operand.hbm [shape: f32[1,1], index: 27, kind: output, shape index: {3}]
  %s28 = inlined_call_operand.hbm [shape: f32[1,1], index: 28, kind: output, shape index: {4}]
  %29 = xla_tuple %s24, %s25, %s26, %s27, %s28
  %s30 = sld [smem:[#allocation0]]
  $region165: #{vgrnn_forward.1} parent=0
    _
  %s32 = ssub.s32 1, %s30
  %s33 = scalar_select 0, %s32, %s30
  $region1: #{vgrnn_forward.1} parent=0
    #allocation2 [shape = 'u8[16384]{0}', space=vmem, size = 0x4000, scoped, tag = 'output window, operand 2, single buffered']
    #allocation3 [shape = 's32[2]{0}', space=sflag, size = 0x8, scoped, tag = 'scoped memory for vgrnn_forward.1']
    #allocation4 [shape = 'u8[512]{0}', space=vmem, size = 0x400, scoped, tag = 'output window, operand 3, single buffered']
    #allocation5 [shape = 's32[1]{0}', space=sflag, size = 0x4, scoped, tag = 'scoped memory for vgrnn_forward.1']
    #allocation6 [shape = 'u8[512]{0}', space=vmem, size = 0x400, scoped, tag = 'output window, operand 4, single buffered']
    %34 = vsyncpa [#allocation3], 0
    %35 = vsyncpa [#allocation5], 0
    loop: start=0, step=1, limit=6
    $region2: #{vgrnn_forward.1} parent=1 // loop_pre_header
      _
    $region3: #{vgrnn_forward.1} parent=1 // loop_header
      %s37 = sphi 0, %s41
      %p38 = scmp.ge.s32.totalorder %s37, 6
      %s47 = sphi 0, %s49
      %s50 = sphi 0, %s47
      %s51 = sphi 0, %s50
      %s67 = sphi 0, %s51
      %s73 = sphi 0, %s75
      %s76 = sphi 0, %s73
      %s77 = sphi 0, %s76
      %s93 = sphi 0, %s77
      %s99 = sphi 0, %s101
      %s102 = sphi 0, %s99
      %s103 = sphi 0, %s102
      %s119 = sphi 0, %s103
      %s125 = sphi 0, %s127
      %s128 = sphi 0, %s125
      %s129 = sphi 0, %s128
      %s145 = sphi 0, %s129
      %s149 = sphi 0, %s149
      %s151 = sphi 0, %s149
      %s152 = sphi 0, %s151
      %s166 = sphi 0, %s152
      %s170 = sphi 0, %s170
      %s172 = sphi 0, %s170
      %s173 = sphi 0, %s172
      %s187 = sphi 0, %s173
      %s191 = sphi 0, %s191
      %s193 = sphi 0, %s191
      %s194 = sphi 0, %s193
      %s208 = sphi 0, %s194
      %s212 = sphi 0, %s212
      %s214 = sphi 0, %s212
      %s215 = sphi 0, %s214
      %s229 = sphi 0, %s215
      %s233 = sphi 0, %s233
      %s235 = sphi 0, %s233
      %s236 = sphi 0, %s235
      %s250 = sphi 0, %s236
      %s254 = sphi 0, %s254
      %s256 = sphi 0, %s254
      %s257 = sphi 0, %s256
      %s271 = sphi 0, %s257
      %s275 = sphi 0, %s275
      %s277 = sphi 0, %s275
      %s278 = sphi 0, %s277
      %s292 = sphi 0, %s278
      %s296 = sphi 0, %s296
      %s298 = sphi 0, %s296
      %s299 = sphi 0, %s298
      %s313 = sphi 0, %s299
      %s317 = sphi 0, %s317
      %s319 = sphi 0, %s317
      %s320 = sphi 0, %s319
      %s334 = sphi 0, %s320
      %s338 = sphi 0, %s338
      %s340 = sphi 0, %s338
      %s341 = sphi 0, %s340
      %s355 = sphi 0, %s341
      %s359 = sphi 0, %s359
      %s361 = sphi 0, %s359
      %s362 = sphi 0, %s361
      %s376 = sphi 0, %s362
      %s380 = sphi 0, %s380
      %s382 = sphi 0, %s380
      %s383 = sphi 0, %s382
      %s397 = sphi 0, %s383
      %s401 = sphi 0, %s401
      %s403 = sphi 0, %s401
      %s404 = sphi 0, %s403
      %s418 = sphi 0, %s404
      %s422 = sphi 0, %s422
      %s424 = sphi 0, %s422
      %s425 = sphi 0, %s424
      %s439 = sphi 0, %s425
      %s443 = sphi 0, %s443
      %s445 = sphi 0, %s443
      %s446 = sphi 0, %s445
      %s460 = sphi 0, %s446
      %s464 = sphi 0, %s464
      %s466 = sphi 0, %s464
      %s467 = sphi 0, %s466
      %s481 = sphi 0, %s467
      %s485 = sphi 0, %s485
      %s487 = sphi 0, %s485
      %s488 = sphi 0, %s487
      %s502 = sphi 0, %s488
      %s506 = sphi 0, %s506
      %s508 = sphi 0, %s506
      %s509 = sphi 0, %s508
      %s523 = sphi 0, %s509
      %s527 = sphi 0, %s527
      %s529 = sphi 0, %s527
      %s530 = sphi 0, %s529
      %s544 = sphi 0, %s530
      %s548 = sphi 0, %s548
      %s550 = sphi 0, %s548
      %s551 = sphi 0, %s550
      %s565 = sphi 0, %s551
      %s571 = sphi 0, %s573
      %s574 = sphi 0, %s571
      %s575 = sphi 0, %s574
      %s591 = sphi 0, %s575
      %s597 = sphi 0, %s599
      %s600 = sphi 0, %s597
      %s601 = sphi 0, %s600
      %s617 = sphi 0, %s601
      %s621 = sphi 0, %s621
      %s623 = sphi 0, %s621
      %s624 = sphi 0, %s623
      %s638 = sphi 0, %s624
      %s642 = sphi 0, %s642
      %s644 = sphi 0, %s642
      %s645 = sphi 0, %s644
      %s659 = sphi 0, %s645
      %s663 = sphi 0, %s663
      %s665 = sphi 0, %s663
      %s666 = sphi 0, %s665
      %s680 = sphi 0, %s666
    $region4: #{vgrnn_forward.1} parent=1 // loop_header_branch
      %40 = sbr.rel (%p38) target = $region8
    $region5: #{vgrnn_forward.1} parent=1 // loop_body
      %s42 = ssub.s32 %s37, 1
      %s43 = ssub.s32 %s37, 2
      %s44 = sadd.s32 %s37, 1
      %s45 = ssub.s32 %s37, %s44
      %p46 = scmp.eq.s32.totalorder %s45, 0
      %s48 = sadd.s32 %s47, 1
      %s49 = scalar_select %p46, %s47, %s48
      %p52 = pneg %p46
      %p53 = scmp.eq.s32.totalorder %s37, 3
      %p54 = por %p52, %p53
      %p55 = scmp.ne.s32.totalorder %s47, %s50
      %p56 = scmp.eq.s32.totalorder %s37, 0
      %p57 = por %p55, %p56
      %p58 = scmp.ne.s32.totalorder %s47, %s50
      %p59 = scmp.eq.s32.totalorder %s42, 3
      %p60 = por %p58, %p59
      %p61 = scmp.ne.s32.totalorder %s50, %s51
      %p62 = scmp.eq.s32.totalorder %s42, 0
      %p63 = por %p61, %p62
      %p64 = scmp.ne.s32.totalorder %s50, %s51
      %p65 = scmp.eq.s32.totalorder %s43, 3
      %p66 = por %p64, %p65
      %p68 = scmp.ne.s32.totalorder %s51, %s67
      %p69 = scmp.eq.s32.totalorder %s43, 0
      %p70 = por %p68, %p69
      %s71 = ssub.s32 %s37, %s44
      %p72 = scmp.eq.s32.totalorder %s71, 0
      %s74 = sadd.s32 %s73, 1
      %s75 = scalar_select %p72, %s73, %s74
      %p78 = pneg %p72
      %p79 = scmp.eq.s32.totalorder %s37, 3
      %p80 = por %p78, %p79
      %p81 = scmp.ne.s32.totalorder %s73, %s76
      %p82 = scmp.eq.s32.totalorder %s37, 0
      %p83 = por %p81, %p82
      %p84 = scmp.ne.s32.totalorder %s73, %s76
      %p85 = scmp.eq.s32.totalorder %s42, 3
      %p86 = por %p84, %p85
      %p87 = scmp.ne.s32.totalorder %s76, %s77
      %p88 = scmp.eq.s32.totalorder %s42, 0
      %p89 = por %p87, %p88
      %p90 = scmp.ne.s32.totalorder %s76, %s77
      %p91 = scmp.eq.s32.totalorder %s43, 3
      %p92 = por %p90, %p91
      %p94 = scmp.ne.s32.totalorder %s77, %s93
      %p95 = scmp.eq.s32.totalorder %s43, 0
      %p96 = por %p94, %p95
      %s97 = ssub.s32 %s37, %s44
      %p98 = scmp.eq.s32.totalorder %s97, 0
      %s100 = sadd.s32 %s99, 1
      %s101 = scalar_select %p98, %s99, %s100
      %p104 = pneg %p98
      %p105 = scmp.eq.s32.totalorder %s37, 3
      %p106 = por %p104, %p105
      %p107 = scmp.ne.s32.totalorder %s99, %s102
      %p108 = scmp.eq.s32.totalorder %s37, 0
      %p109 = por %p107, %p108
      %p110 = scmp.ne.s32.totalorder %s99, %s102
      %p111 = scmp.eq.s32.totalorder %s42, 3
      %p112 = por %p110, %p111
      %p113 = scmp.ne.s32.totalorder %s102, %s103
      %p114 = scmp.eq.s32.totalorder %s42, 0
      %p115 = por %p113, %p114
      %p116 = scmp.ne.s32.totalorder %s102, %s103
      %p117 = scmp.eq.s32.totalorder %s43, 3
      %p118 = por %p116, %p117
      %p120 = scmp.ne.s32.totalorder %s103, %s119
      %p121 = scmp.eq.s32.totalorder %s43, 0
      %p122 = por %p120, %p121
      %s123 = ssub.s32 %s37, %s44
      %p124 = scmp.eq.s32.totalorder %s123, 0
      %s126 = sadd.s32 %s125, 1
      %s127 = scalar_select %p124, %s125, %s126
      %p130 = pneg %p124
      %p131 = scmp.eq.s32.totalorder %s37, 3
      %p132 = por %p130, %p131
      %p133 = scmp.ne.s32.totalorder %s125, %s128
      %p134 = scmp.eq.s32.totalorder %s37, 0
      %p135 = por %p133, %p134
      %p136 = scmp.ne.s32.totalorder %s125, %s128
      %p137 = scmp.eq.s32.totalorder %s42, 3
      %p138 = por %p136, %p137
      %p139 = scmp.ne.s32.totalorder %s128, %s129
      %p140 = scmp.eq.s32.totalorder %s42, 0
      %p141 = por %p139, %p140
      %p142 = scmp.ne.s32.totalorder %s128, %s129
      %p143 = scmp.eq.s32.totalorder %s43, 3
      %p144 = por %p142, %p143
      %p146 = scmp.ne.s32.totalorder %s129, %s145
      %p147 = scmp.eq.s32.totalorder %s43, 0
      %p148 = por %p146, %p147
      %s150 = sadd.s32 %s149, 1
      %p153 = scmp.eq.s32.totalorder %s37, 3
      %p154 = scmp.ne.s32.totalorder %s149, %s151
      %p155 = scmp.eq.s32.totalorder %s37, 0
      %p156 = por %p154, %p155
      %p157 = scmp.ne.s32.totalorder %s149, %s151
      %p158 = scmp.eq.s32.totalorder %s42, 3
      %p159 = por %p157, %p158
      %p160 = scmp.ne.s32.totalorder %s151, %s152
      %p161 = scmp.eq.s32.totalorder %s42, 0
      %p162 = por %p160, %p161
      %p163 = scmp.ne.s32.totalorder %s151, %s152
      %p164 = scmp.eq.s32.totalorder %s43, 3
      %p165 = por %p163, %p164
      %p167 = scmp.ne.s32.totalorder %s152, %s166
      %p168 = scmp.eq.s32.totalorder %s43, 0
      %p169 = por %p167, %p168
      %s171 = sadd.s32 %s170, 1
      %p174 = scmp.eq.s32.totalorder %s37, 3
      %p175 = scmp.ne.s32.totalorder %s170, %s172
      %p176 = scmp.eq.s32.totalorder %s37, 0
      %p177 = por %p175, %p176
      %p178 = scmp.ne.s32.totalorder %s170, %s172
      %p179 = scmp.eq.s32.totalorder %s42, 3
      %p180 = por %p178, %p179
      %p181 = scmp.ne.s32.totalorder %s172, %s173
      %p182 = scmp.eq.s32.totalorder %s42, 0
      %p183 = por %p181, %p182
      %p184 = scmp.ne.s32.totalorder %s172, %s173
      %p185 = scmp.eq.s32.totalorder %s43, 3
      %p186 = por %p184, %p185
      %p188 = scmp.ne.s32.totalorder %s173, %s187
      %p189 = scmp.eq.s32.totalorder %s43, 0
      %p190 = por %p188, %p189
      %s192 = sadd.s32 %s191, 1
      %p195 = scmp.eq.s32.totalorder %s37, 3
      %p196 = scmp.ne.s32.totalorder %s191, %s193
      %p197 = scmp.eq.s32.totalorder %s37, 0
      %p198 = por %p196, %p197
      %p199 = scmp.ne.s32.totalorder %s191, %s193
      %p200 = scmp.eq.s32.totalorder %s42, 3
      %p201 = por %p199, %p200
      %p202 = scmp.ne.s32.totalorder %s193, %s194
      %p203 = scmp.eq.s32.totalorder %s42, 0
      %p204 = por %p202, %p203
      %p205 = scmp.ne.s32.totalorder %s193, %s194
      %p206 = scmp.eq.s32.totalorder %s43, 3
      %p207 = por %p205, %p206
      %p209 = scmp.ne.s32.totalorder %s194, %s208
      %p210 = scmp.eq.s32.totalorder %s43, 0
      %p211 = por %p209, %p210
      %s213 = sadd.s32 %s212, 1
      %p216 = scmp.eq.s32.totalorder %s37, 3
      %p217 = scmp.ne.s32.totalorder %s212, %s214
      %p218 = scmp.eq.s32.totalorder %s37, 0
      %p219 = por %p217, %p218
      %p220 = scmp.ne.s32.totalorder %s212, %s214
      %p221 = scmp.eq.s32.totalorder %s42, 3
      %p222 = por %p220, %p221
      %p223 = scmp.ne.s32.totalorder %s214, %s215
      %p224 = scmp.eq.s32.totalorder %s42, 0
      %p225 = por %p223, %p224
      %p226 = scmp.ne.s32.totalorder %s214, %s215
      %p227 = scmp.eq.s32.totalorder %s43, 3
      %p228 = por %p226, %p227
      %p230 = scmp.ne.s32.totalorder %s215, %s229
      %p231 = scmp.eq.s32.totalorder %s43, 0
      %p232 = por %p230, %p231
      %s234 = sadd.s32 %s233, 1
      %p237 = scmp.eq.s32.totalorder %s37, 3
      %p238 = scmp.ne.s32.totalorder %s233, %s235
      %p239 = scmp.eq.s32.totalorder %s37, 0
      %p240 = por %p238, %p239
      %p241 = scmp.ne.s32.totalorder %s233, %s235
      %p242 = scmp.eq.s32.totalorder %s42, 3
      %p243 = por %p241, %p242
      %p244 = scmp.ne.s32.totalorder %s235, %s236
      %p245 = scmp.eq.s32.totalorder %s42, 0
      %p246 = por %p244, %p245
      %p247 = scmp.ne.s32.totalorder %s235, %s236
      %p248 = scmp.eq.s32.totalorder %s43, 3
      %p249 = por %p247, %p248
      %p251 = scmp.ne.s32.totalorder %s236, %s250
      %p252 = scmp.eq.s32.totalorder %s43, 0
      %p253 = por %p251, %p252
      %s255 = sadd.s32 %s254, 1
      %p258 = scmp.eq.s32.totalorder %s37, 3
      %p259 = scmp.ne.s32.totalorder %s254, %s256
      %p260 = scmp.eq.s32.totalorder %s37, 0
      %p261 = por %p259, %p260
      %p262 = scmp.ne.s32.totalorder %s254, %s256
      %p263 = scmp.eq.s32.totalorder %s42, 3
      %p264 = por %p262, %p263
      %p265 = scmp.ne.s32.totalorder %s256, %s257
      %p266 = scmp.eq.s32.totalorder %s42, 0
      %p267 = por %p265, %p266
      %p268 = scmp.ne.s32.totalorder %s256, %s257
      %p269 = scmp.eq.s32.totalorder %s43, 3
      %p270 = por %p268, %p269
      %p272 = scmp.ne.s32.totalorder %s257, %s271
      %p273 = scmp.eq.s32.totalorder %s43, 0
      %p274 = por %p272, %p273
      %s276 = sadd.s32 %s275, 1
      %p279 = scmp.eq.s32.totalorder %s37, 3
      %p280 = scmp.ne.s32.totalorder %s275, %s277
      %p281 = scmp.eq.s32.totalorder %s37, 0
      %p282 = por %p280, %p281
      %p283 = scmp.ne.s32.totalorder %s275, %s277
      %p284 = scmp.eq.s32.totalorder %s42, 3
      %p285 = por %p283, %p284
      %p286 = scmp.ne.s32.totalorder %s277, %s278
      %p287 = scmp.eq.s32.totalorder %s42, 0
      %p288 = por %p286, %p287
      %p289 = scmp.ne.s32.totalorder %s277, %s278
      %p290 = scmp.eq.s32.totalorder %s43, 3
      %p291 = por %p289, %p290
      %p293 = scmp.ne.s32.totalorder %s278, %s292
      %p294 = scmp.eq.s32.totalorder %s43, 0
      %p295 = por %p293, %p294
      %s297 = sadd.s32 %s296, 1
      %p300 = scmp.eq.s32.totalorder %s37, 3
      %p301 = scmp.ne.s32.totalorder %s296, %s298
      %p302 = scmp.eq.s32.totalorder %s37, 0
      %p303 = por %p301, %p302
      %p304 = scmp.ne.s32.totalorder %s296, %s298
      %p305 = scmp.eq.s32.totalorder %s42, 3
      %p306 = por %p304, %p305
      %p307 = scmp.ne.s32.totalorder %s298, %s299
      %p308 = scmp.eq.s32.totalorder %s42, 0
      %p309 = por %p307, %p308
      %p310 = scmp.ne.s32.totalorder %s298, %s299
      %p311 = scmp.eq.s32.totalorder %s43, 3
      %p312 = por %p310, %p311
      %p314 = scmp.ne.s32.totalorder %s299, %s313
      %p315 = scmp.eq.s32.totalorder %s43, 0
      %p316 = por %p314, %p315
      %s318 = sadd.s32 %s317, 1
      %p321 = scmp.eq.s32.totalorder %s37, 3
      %p322 = scmp.ne.s32.totalorder %s317, %s319
      %p323 = scmp.eq.s32.totalorder %s37, 0
      %p324 = por %p322, %p323
      %p325 = scmp.ne.s32.totalorder %s317, %s319
      %p326 = scmp.eq.s32.totalorder %s42, 3
      %p327 = por %p325, %p326
      %p328 = scmp.ne.s32.totalorder %s319, %s320
      %p329 = scmp.eq.s32.totalorder %s42, 0
      %p330 = por %p328, %p329
      %p331 = scmp.ne.s32.totalorder %s319, %s320
      %p332 = scmp.eq.s32.totalorder %s43, 3
      %p333 = por %p331, %p332
      %p335 = scmp.ne.s32.totalorder %s320, %s334
      %p336 = scmp.eq.s32.totalorder %s43, 0
      %p337 = por %p335, %p336
      %s339 = sadd.s32 %s338, 1
      %p342 = scmp.eq.s32.totalorder %s37, 3
      %p343 = scmp.ne.s32.totalorder %s338, %s340
      %p344 = scmp.eq.s32.totalorder %s37, 0
      %p345 = por %p343, %p344
      %p346 = scmp.ne.s32.totalorder %s338, %s340
      %p347 = scmp.eq.s32.totalorder %s42, 3
      %p348 = por %p346, %p347
      %p349 = scmp.ne.s32.totalorder %s340, %s341
      %p350 = scmp.eq.s32.totalorder %s42, 0
      %p351 = por %p349, %p350
      %p352 = scmp.ne.s32.totalorder %s340, %s341
      %p353 = scmp.eq.s32.totalorder %s43, 3
      %p354 = por %p352, %p353
      %p356 = scmp.ne.s32.totalorder %s341, %s355
      %p357 = scmp.eq.s32.totalorder %s43, 0
      %p358 = por %p356, %p357
      %s360 = sadd.s32 %s359, 1
      %p363 = scmp.eq.s32.totalorder %s37, 3
      %p364 = scmp.ne.s32.totalorder %s359, %s361
      %p365 = scmp.eq.s32.totalorder %s37, 0
      %p366 = por %p364, %p365
      %p367 = scmp.ne.s32.totalorder %s359, %s361
      %p368 = scmp.eq.s32.totalorder %s42, 3
      %p369 = por %p367, %p368
      %p370 = scmp.ne.s32.totalorder %s361, %s362
      %p371 = scmp.eq.s32.totalorder %s42, 0
      %p372 = por %p370, %p371
      %p373 = scmp.ne.s32.totalorder %s361, %s362
      %p374 = scmp.eq.s32.totalorder %s43, 3
      %p375 = por %p373, %p374
      %p377 = scmp.ne.s32.totalorder %s362, %s376
      %p378 = scmp.eq.s32.totalorder %s43, 0
      %p379 = por %p377, %p378
      %s381 = sadd.s32 %s380, 1
      %p384 = scmp.eq.s32.totalorder %s37, 3
      %p385 = scmp.ne.s32.totalorder %s380, %s382
      %p386 = scmp.eq.s32.totalorder %s37, 0
      %p387 = por %p385, %p386
      %p388 = scmp.ne.s32.totalorder %s380, %s382
      %p389 = scmp.eq.s32.totalorder %s42, 3
      %p390 = por %p388, %p389
      %p391 = scmp.ne.s32.totalorder %s382, %s383
      %p392 = scmp.eq.s32.totalorder %s42, 0
      %p393 = por %p391, %p392
      %p394 = scmp.ne.s32.totalorder %s382, %s383
      %p395 = scmp.eq.s32.totalorder %s43, 3
      %p396 = por %p394, %p395
      %p398 = scmp.ne.s32.totalorder %s383, %s397
      %p399 = scmp.eq.s32.totalorder %s43, 0
      %p400 = por %p398, %p399
      %s402 = sadd.s32 %s401, 1
      %p405 = scmp.eq.s32.totalorder %s37, 3
      %p406 = scmp.ne.s32.totalorder %s401, %s403
      %p407 = scmp.eq.s32.totalorder %s37, 0
      %p408 = por %p406, %p407
      %p409 = scmp.ne.s32.totalorder %s401, %s403
      %p410 = scmp.eq.s32.totalorder %s42, 3
      %p411 = por %p409, %p410
      %p412 = scmp.ne.s32.totalorder %s403, %s404
      %p413 = scmp.eq.s32.totalorder %s42, 0
      %p414 = por %p412, %p413
      %p415 = scmp.ne.s32.totalorder %s403, %s404
      %p416 = scmp.eq.s32.totalorder %s43, 3
      %p417 = por %p415, %p416
      %p419 = scmp.ne.s32.totalorder %s404, %s418
      %p420 = scmp.eq.s32.totalorder %s43, 0
      %p421 = por %p419, %p420
      %s423 = sadd.s32 %s422, 1
      %p426 = scmp.eq.s32.totalorder %s37, 3
      %p427 = scmp.ne.s32.totalorder %s422, %s424
      %p428 = scmp.eq.s32.totalorder %s37, 0
      %p429 = por %p427, %p428
      %p430 = scmp.ne.s32.totalorder %s422, %s424
      %p431 = scmp.eq.s32.totalorder %s42, 3
      %p432 = por %p430, %p431
      %p433 = scmp.ne.s32.totalorder %s424, %s425
      %p434 = scmp.eq.s32.totalorder %s42, 0
      %p435 = por %p433, %p434
      %p436 = scmp.ne.s32.totalorder %s424, %s425
      %p437 = scmp.eq.s32.totalorder %s43, 3
      %p438 = por %p436, %p437
      %p440 = scmp.ne.s32.totalorder %s425, %s439
      %p441 = scmp.eq.s32.totalorder %s43, 0
      %p442 = por %p440, %p441
      %s444 = sadd.s32 %s443, 1
      %p447 = scmp.eq.s32.totalorder %s37, 3
      %p448 = scmp.ne.s32.totalorder %s443, %s445
      %p449 = scmp.eq.s32.totalorder %s37, 0
      %p450 = por %p448, %p449
      %p451 = scmp.ne.s32.totalorder %s443, %s445
      %p452 = scmp.eq.s32.totalorder %s42, 3
      %p453 = por %p451, %p452
      %p454 = scmp.ne.s32.totalorder %s445, %s446
      %p455 = scmp.eq.s32.totalorder %s42, 0
      %p456 = por %p454, %p455
      %p457 = scmp.ne.s32.totalorder %s445, %s446
      %p458 = scmp.eq.s32.totalorder %s43, 3
      %p459 = por %p457, %p458
      %p461 = scmp.ne.s32.totalorder %s446, %s460
      %p462 = scmp.eq.s32.totalorder %s43, 0
      %p463 = por %p461, %p462
      %s465 = sadd.s32 %s464, 1
      %p468 = scmp.eq.s32.totalorder %s37, 3
      %p469 = scmp.ne.s32.totalorder %s464, %s466
      %p470 = scmp.eq.s32.totalorder %s37, 0
      %p471 = por %p469, %p470
      %p472 = scmp.ne.s32.totalorder %s464, %s466
      %p473 = scmp.eq.s32.totalorder %s42, 3
      %p474 = por %p472, %p473
      %p475 = scmp.ne.s32.totalorder %s466, %s467
      %p476 = scmp.eq.s32.totalorder %s42, 0
      %p477 = por %p475, %p476
      %p478 = scmp.ne.s32.totalorder %s466, %s467
      %p479 = scmp.eq.s32.totalorder %s43, 3
      %p480 = por %p478, %p479
      %p482 = scmp.ne.s32.totalorder %s467, %s481
      %p483 = scmp.eq.s32.totalorder %s43, 0
      %p484 = por %p482, %p483
      %s486 = sadd.s32 %s485, 1
      %p489 = scmp.eq.s32.totalorder %s37, 3
      %p490 = scmp.ne.s32.totalorder %s485, %s487
      %p491 = scmp.eq.s32.totalorder %s37, 0
      %p492 = por %p490, %p491
      %p493 = scmp.ne.s32.totalorder %s485, %s487
      %p494 = scmp.eq.s32.totalorder %s42, 3
      %p495 = por %p493, %p494
      %p496 = scmp.ne.s32.totalorder %s487, %s488
      %p497 = scmp.eq.s32.totalorder %s42, 0
      %p498 = por %p496, %p497
      %p499 = scmp.ne.s32.totalorder %s487, %s488
      %p500 = scmp.eq.s32.totalorder %s43, 3
      %p501 = por %p499, %p500
      %p503 = scmp.ne.s32.totalorder %s488, %s502
      %p504 = scmp.eq.s32.totalorder %s43, 0
      %p505 = por %p503, %p504
      %s507 = sadd.s32 %s506, 1
      %p510 = scmp.eq.s32.totalorder %s37, 3
      %p511 = scmp.ne.s32.totalorder %s506, %s508
      %p512 = scmp.eq.s32.totalorder %s37, 0
      %p513 = por %p511, %p512
      %p514 = scmp.ne.s32.totalorder %s506, %s508
      %p515 = scmp.eq.s32.totalorder %s42, 3
      %p516 = por %p514, %p515
      %p517 = scmp.ne.s32.totalorder %s508, %s509
      %p518 = scmp.eq.s32.totalorder %s42, 0
      %p519 = por %p517, %p518
      %p520 = scmp.ne.s32.totalorder %s508, %s509
      %p521 = scmp.eq.s32.totalorder %s43, 3
      %p522 = por %p520, %p521
      %p524 = scmp.ne.s32.totalorder %s509, %s523
      %p525 = scmp.eq.s32.totalorder %s43, 0
      %p526 = por %p524, %p525
      %s528 = sadd.s32 %s527, 1
      %p531 = scmp.eq.s32.totalorder %s37, 3
      %p532 = scmp.ne.s32.totalorder %s527, %s529
      %p533 = scmp.eq.s32.totalorder %s37, 0
      %p534 = por %p532, %p533
      %p535 = scmp.ne.s32.totalorder %s527, %s529
      %p536 = scmp.eq.s32.totalorder %s42, 3
      %p537 = por %p535, %p536
      %p538 = scmp.ne.s32.totalorder %s529, %s530
      %p539 = scmp.eq.s32.totalorder %s42, 0
      %p540 = por %p538, %p539
      %p541 = scmp.ne.s32.totalorder %s529, %s530
      %p542 = scmp.eq.s32.totalorder %s43, 3
      %p543 = por %p541, %p542
      %p545 = scmp.ne.s32.totalorder %s530, %s544
      %p546 = scmp.eq.s32.totalorder %s43, 0
      %p547 = por %p545, %p546
      %s549 = sadd.s32 %s548, 1
      %p552 = scmp.eq.s32.totalorder %s37, 3
      %p553 = scmp.ne.s32.totalorder %s548, %s550
      %p554 = scmp.eq.s32.totalorder %s37, 0
      %p555 = por %p553, %p554
      %p556 = scmp.ne.s32.totalorder %s548, %s550
      %p557 = scmp.eq.s32.totalorder %s42, 3
      %p558 = por %p556, %p557
      %p559 = scmp.ne.s32.totalorder %s550, %s551
      %p560 = scmp.eq.s32.totalorder %s42, 0
      %p561 = por %p559, %p560
      %p562 = scmp.ne.s32.totalorder %s550, %s551
      %p563 = scmp.eq.s32.totalorder %s43, 3
      %p564 = por %p562, %p563
      %p566 = scmp.ne.s32.totalorder %s551, %s565
      %p567 = scmp.eq.s32.totalorder %s43, 0
      %p568 = por %p566, %p567
      %s569 = ssub.s32 %s37, %s44
      %p570 = scmp.eq.s32.totalorder %s569, 0
      %s572 = sadd.s32 %s571, 1
      %s573 = scalar_select %p570, %s571, %s572
      %p576 = pneg %p570
      %p577 = scmp.eq.s32.totalorder %s37, 3
      %p578 = por %p576, %p577
      %p579 = scmp.ne.s32.totalorder %s571, %s574
      %p580 = scmp.eq.s32.totalorder %s37, 0
      %p581 = por %p579, %p580
      %p582 = scmp.ne.s32.totalorder %s571, %s574
      %p583 = scmp.eq.s32.totalorder %s42, 3
      %p584 = por %p582, %p583
      %p585 = scmp.ne.s32.totalorder %s574, %s575
      %p586 = scmp.eq.s32.totalorder %s42, 0
      %p587 = por %p585, %p586
      %p588 = scmp.ne.s32.totalorder %s574, %s575
      %p589 = scmp.eq.s32.totalorder %s43, 3
      %p590 = por %p588, %p589
      %p592 = scmp.ne.s32.totalorder %s575, %s591
      %p593 = scmp.eq.s32.totalorder %s43, 0
      %p594 = por %p592, %p593
      %s595 = ssub.s32 %s37, %s44
      %p596 = scmp.eq.s32.totalorder %s595, 0
      %s598 = sadd.s32 %s597, 1
      %s599 = scalar_select %p596, %s597, %s598
      %p602 = pneg %p596
      %p603 = scmp.eq.s32.totalorder %s37, 3
      %p604 = por %p602, %p603
      %p605 = scmp.ne.s32.totalorder %s597, %s600
      %p606 = scmp.eq.s32.totalorder %s37, 0
      %p607 = por %p605, %p606
      %p608 = scmp.ne.s32.totalorder %s597, %s600
      %p609 = scmp.eq.s32.totalorder %s42, 3
      %p610 = por %p608, %p609
      %p611 = scmp.ne.s32.totalorder %s600, %s601
      %p612 = scmp.eq.s32.totalorder %s42, 0
      %p613 = por %p611, %p612
      %p614 = scmp.ne.s32.totalorder %s600, %s601
      %p615 = scmp.eq.s32.totalorder %s43, 3
      %p616 = por %p614, %p615
      %p618 = scmp.ne.s32.totalorder %s601, %s617
      %p619 = scmp.eq.s32.totalorder %s43, 0
      %p620 = por %p618, %p619
      %s622 = sadd.s32 %s621, 1
      %p625 = scmp.eq.s32.totalorder %s37, 3
      %p626 = scmp.ne.s32.totalorder %s621, %s623
      %p627 = scmp.eq.s32.totalorder %s37, 0
      %p628 = por %p626, %p627
      %p629 = scmp.ne.s32.totalorder %s621, %s623
      %p630 = scmp.eq.s32.totalorder %s42, 3
      %p631 = por %p629, %p630
      %p632 = scmp.ne.s32.totalorder %s623, %s624
      %p633 = scmp.eq.s32.totalorder %s42, 0
      %p634 = por %p632, %p633
      %p635 = scmp.ne.s32.totalorder %s623, %s624
      %p636 = scmp.eq.s32.totalorder %s43, 3
      %p637 = por %p635, %p636
      %p639 = scmp.ne.s32.totalorder %s624, %s638
      %p640 = scmp.eq.s32.totalorder %s43, 0
      %p641 = por %p639, %p640
      %s643 = sadd.s32 %s642, 1
      %p646 = scmp.eq.s32.totalorder %s37, 3
      %p647 = scmp.ne.s32.totalorder %s642, %s644
      %p648 = scmp.eq.s32.totalorder %s37, 0
      %p649 = por %p647, %p648
      %p650 = scmp.ne.s32.totalorder %s642, %s644
      %p651 = scmp.eq.s32.totalorder %s42, 3
      %p652 = por %p650, %p651
      %p653 = scmp.ne.s32.totalorder %s644, %s645
      %p654 = scmp.eq.s32.totalorder %s42, 0
      %p655 = por %p653, %p654
      %p656 = scmp.ne.s32.totalorder %s644, %s645
      %p657 = scmp.eq.s32.totalorder %s43, 3
      %p658 = por %p656, %p657
      %p660 = scmp.ne.s32.totalorder %s645, %s659
      %p661 = scmp.eq.s32.totalorder %s43, 0
      %p662 = por %p660, %p661
      %s664 = sadd.s32 %s663, 1
      %p667 = scmp.eq.s32.totalorder %s37, 3
      %p668 = scmp.ne.s32.totalorder %s663, %s665
      %p669 = scmp.eq.s32.totalorder %s37, 0
      %p670 = por %p668, %p669
      %p671 = scmp.ne.s32.totalorder %s663, %s665
      %p672 = scmp.eq.s32.totalorder %s42, 3
      %p673 = por %p671, %p672
      %p674 = scmp.ne.s32.totalorder %s665, %s666
      %p675 = scmp.eq.s32.totalorder %s42, 0
      %p676 = por %p674, %p675
      %p677 = scmp.ne.s32.totalorder %s665, %s666
      %p678 = scmp.eq.s32.totalorder %s43, 3
      %p679 = por %p677, %p678
      %p681 = scmp.ne.s32.totalorder %s666, %s680
      %p682 = scmp.eq.s32.totalorder %s43, 0
      %p683 = por %p681, %p682
      %p684 = scmp.le.s32.totalorder 1, %s37
      %p685 = scmp.lt.s32.totalorder %s37, 5
      %p686 = pnand %p684, %p685
      %p687 = pneg %p686
      // Predicated region
      $region9: #{vgrnn_forward.1} parent=5 // pred_check
        _
      $region10: #{vgrnn_forward.1} parent=5 // pred_check_branch
        %689 = sbr.rel (%p686) target = $region12
      $region11: #{vgrnn_forward.1} parent=5 // pred_region
        %s690 = ssub.s32 %s37, 1
        // Predicated region
        $region13: #{vgrnn_forward.1} parent=11 // pred_check
          %p691 = pneg %p162
        $region14: #{vgrnn_forward.1} parent=11 // pred_check_branch
          %693 = sbr.rel (%p691) target = $region16
        $region15: #{vgrnn_forward.1} parent=11 // pred_region
          _
        $region16: #{vgrnn_forward.1} parent=11 // pred_fallthru
          _
        // Predicated region
        $region17: #{vgrnn_forward.1} parent=11 // pred_check
          %p694 = pneg %p183
        $region18: #{vgrnn_forward.1} parent=11 // pred_check_branch
          %696 = sbr.rel (%p694) target = $region20
        $region19: #{vgrnn_forward.1} parent=11 // pred_region
          _
        $region20: #{vgrnn_forward.1} parent=11 // pred_fallthru
          _
        // Predicated region
        $region21: #{vgrnn_forward.1} parent=11 // pred_check
          %p697 = pneg %p204
        $region22: #{vgrnn_forward.1} parent=11 // pred_check_branch
          %699 = sbr.rel (%p697) target = $region24
        $region23: #{vgrnn_forward.1} parent=11 // pred_region
          _
        $region24: #{vgrnn_forward.1} parent=11 // pred_fallthru
          _
        // Predicated region
        $region25: #{vgrnn_forward.1} parent=11 // pred_check
          %p700 = pneg %p225
        $region26: #{vgrnn_forward.1} parent=11 // pred_check_branch
          %702 = sbr.rel (%p700) target = $region28
        $region27: #{vgrnn_forward.1} parent=11 // pred_region
          _
        $region28: #{vgrnn_forward.1} parent=11 // pred_fallthru
          _
        // Predicated region
        $region29: #{vgrnn_forward.1} parent=11 // pred_check
          %p703 = pneg %p246
        $region30: #{vgrnn_forward.1} parent=11 // pred_check_branch
          %705 = sbr.rel (%p703) target = $region32
        $region31: #{vgrnn_forward.1} parent=11 // pred_region
          _
        $region32: #{vgrnn_forward.1} parent=11 // pred_fallthru
          _
        // Predicated region
        $region33: #{vgrnn_forward.1} parent=11 // pred_check
          %p706 = pneg %p267
        $region34: #{vgrnn_forward.1} parent=11 // pred_check_branch
          %708 = sbr.rel (%p706) target = $region36
        $region35: #{vgrnn_forward.1} parent=11 // pred_region
          _
        $region36: #{vgrnn_forward.1} parent=11 // pred_fallthru
          _
        // Predicated region
        $region37: #{vgrnn_forward.1} parent=11 // pred_check
          %p709 = pneg %p288
        $region38: #{vgrnn_forward.1} parent=11 // pred_check_branch
          %711 = sbr.rel (%p709) target = $region40
        $region39: #{vgrnn_forward.1} parent=11 // pred_region
          _
        $region40: #{vgrnn_forward.1} parent=11 // pred_fallthru
          _
        // Predicated region
        $region41: #{vgrnn_forward.1} parent=11 // pred_check
          %p712 = pneg %p309
        $region42: #{vgrnn_forward.1} parent=11 // pred_check_branch
          %714 = sbr.rel (%p712) target = $region44
        $region43: #{vgrnn_forward.1} parent=11 // pred_region
          _
        $region44: #{vgrnn_forward.1} parent=11 // pred_fallthru
          _
        // Predicated region
        $region45: #{vgrnn_forward.1} parent=11 // pred_check
          %p715 = pneg %p330
        $region46: #{vgrnn_forward.1} parent=11 // pred_check_branch
          %717 = sbr.rel (%p715) target = $region48
        $region47: #{vgrnn_forward.1} parent=11 // pred_region
          _
        $region48: #{vgrnn_forward.1} parent=11 // pred_fallthru
          _
        // Predicated region
        $region49: #{vgrnn_forward.1} parent=11 // pred_check
          %p718 = pneg %p351
        $region50: #{vgrnn_forward.1} parent=11 // pred_check_branch
          %720 = sbr.rel (%p718) target = $region52
        $region51: #{vgrnn_forward.1} parent=11 // pred_region
          _
        $region52: #{vgrnn_forward.1} parent=11 // pred_fallthru
          _
        // Predicated region
        $region53: #{vgrnn_forward.1} parent=11 // pred_check
          %p721 = pneg %p372
        $region54: #{vgrnn_forward.1} parent=11 // pred_check_branch
          %723 = sbr.rel (%p721) target = $region56
        $region55: #{vgrnn_forward.1} parent=11 // pred_region
          _
        $region56: #{vgrnn_forward.1} parent=11 // pred_fallthru
          _
        // Predicated region
        $region57: #{vgrnn_forward.1} parent=11 // pred_check
          %p724 = pneg %p393
        $region58: #{vgrnn_forward.1} parent=11 // pred_check_branch
          %726 = sbr.rel (%p724) target = $region60
        $region59: #{vgrnn_forward.1} parent=11 // pred_region
          _
        $region60: #{vgrnn_forward.1} parent=11 // pred_fallthru
          _
        // Predicated region
        $region61: #{vgrnn_forward.1} parent=11 // pred_check
          %p727 = pneg %p414
        $region62: #{vgrnn_forward.1} parent=11 // pred_check_branch
          %729 = sbr.rel (%p727) target = $region64
        $region63: #{vgrnn_forward.1} parent=11 // pred_region
          _
        $region64: #{vgrnn_forward.1} parent=11 // pred_fallthru
          _
        // Predicated region
        $region65: #{vgrnn_forward.1} parent=11 // pred_check
          %p730 = pneg %p435
        $region66: #{vgrnn_forward.1} parent=11 // pred_check_branch
          %732 = sbr.rel (%p730) target = $region68
        $region67: #{vgrnn_forward.1} parent=11 // pred_region
          _
        $region68: #{vgrnn_forward.1} parent=11 // pred_fallthru
          _
        // Predicated region
        $region69: #{vgrnn_forward.1} parent=11 // pred_check
          %p733 = pneg %p456
        $region70: #{vgrnn_forward.1} parent=11 // pred_check_branch
          %735 = sbr.rel (%p733) target = $region72
        $region71: #{vgrnn_forward.1} parent=11 // pred_region
          _
        $region72: #{vgrnn_forward.1} parent=11 // pred_fallthru
          _
        // Predicated region
        $region73: #{vgrnn_forward.1} parent=11 // pred_check
          %p736 = pneg %p477
        $region74: #{vgrnn_forward.1} parent=11 // pred_check_branch
          %738 = sbr.rel (%p736) target = $region76
        $region75: #{vgrnn_forward.1} parent=11 // pred_region
          _
        $region76: #{vgrnn_forward.1} parent=11 // pred_fallthru
          _
        // Predicated region
        $region77: #{vgrnn_forward.1} parent=11 // pred_check
          %p739 = pneg %p498
        $region78: #{vgrnn_forward.1} parent=11 // pred_check_branch
          %741 = sbr.rel (%p739) target = $region80
        $region79: #{vgrnn_forward.1} parent=11 // pred_region
          _
        $region80: #{vgrnn_forward.1} parent=11 // pred_fallthru
          _
        // Predicated region
        $region81: #{vgrnn_forward.1} parent=11 // pred_check
          %p742 = pneg %p519
        $region82: #{vgrnn_forward.1} parent=11 // pred_check_branch
          %744 = sbr.rel (%p742) target = $region84
        $region83: #{vgrnn_forward.1} parent=11 // pred_region
          _
        $region84: #{vgrnn_forward.1} parent=11 // pred_fallthru
          _
        // Predicated region
        $region85: #{vgrnn_forward.1} parent=11 // pred_check
          %p745 = pneg %p540
        $region86: #{vgrnn_forward.1} parent=11 // pred_check_branch
          %747 = sbr.rel (%p745) target = $region88
        $region87: #{vgrnn_forward.1} parent=11 // pred_region
          _
        $region88: #{vgrnn_forward.1} parent=11 // pred_fallthru
          _
        // Predicated region
        $region89: #{vgrnn_forward.1} parent=11 // pred_check
          %p748 = pneg %p561
        $region90: #{vgrnn_forward.1} parent=11 // pred_check_branch
          %750 = sbr.rel (%p748) target = $region92
        $region91: #{vgrnn_forward.1} parent=11 // pred_region
          _
        $region92: #{vgrnn_forward.1} parent=11 // pred_fallthru
          _
      $region12: #{vgrnn_forward.1} parent=5 // pred_fallthru
        _
      %p751 = scmp.lt.s32.totalorder %s37, 4
      // Predicated region
      $region93: #{vgrnn_forward.1} parent=5 // pred_check
        %p752 = pneg %p751
      $region94: #{vgrnn_forward.1} parent=5 // pred_check_branch
        %754 = sbr.rel (%p752) target = $region96
      $region95: #{vgrnn_forward.1} parent=5 // pred_region
        // Predicated region
        $region97: #{vgrnn_forward.1} parent=95 // pred_check
          %p755 = pneg %p57
        $region98: #{vgrnn_forward.1} parent=95 // pred_check_branch
          %757 = sbr.rel (%p755) target = $region100
        $region99: #{vgrnn_forward.1} parent=95 // pred_region
          %p758 = scmp.lt.s32.totalorder %s37, 3
          %s759 = scalar_select %p758, %s37, 3
          %s760 = smul.addr %s759, 2
          %s761 = smul.addr %s760, 8
          %s762 = scalar_lea.vmem %s0, %s761
        $region100: #{vgrnn_forward.1} parent=95 // pred_fallthru
          _
        // Predicated region
        $region101: #{vgrnn_forward.1} parent=95 // pred_check
          %p763 = pneg %p83
        $region102: #{vgrnn_forward.1} parent=95 // pred_check_branch
          %765 = sbr.rel (%p763) target = $region104
        $region103: #{vgrnn_forward.1} parent=95 // pred_region
          %p766 = scmp.lt.s32.totalorder %s37, 3
          %s767 = scalar_select %p766, %s37, 3
          %s768 = smul.addr %s767, 2
          %s769 = smul.addr %s768, 8
          %s770 = scalar_lea.vmem %s1, %s769
        $region104: #{vgrnn_forward.1} parent=95 // pred_fallthru
          _
        // Predicated region
        $region105: #{vgrnn_forward.1} parent=95 // pred_check
          %p771 = pneg %p109
        $region106: #{vgrnn_forward.1} parent=95 // pred_check_branch
          %773 = sbr.rel (%p771) target = $region108
        $region107: #{vgrnn_forward.1} parent=95 // pred_region
          %p774 = scmp.lt.s32.totalorder %s37, 3
          %s775 = scalar_select %p774, %s37, 3
          %s776 = smul.addr %s775, 2
          %s777 = smul.addr %s776, 8
          %s778 = scalar_lea.vmem %s2, %s777
        $region108: #{vgrnn_forward.1} parent=95 // pred_fallthru
          _
        // Predicated region
        $region109: #{vgrnn_forward.1} parent=95 // pred_check
          %p779 = pneg %p135
        $region110: #{vgrnn_forward.1} parent=95 // pred_check_branch
          %781 = sbr.rel (%p779) target = $region112
        $region111: #{vgrnn_forward.1} parent=95 // pred_region
          %p782 = scmp.lt.s32.totalorder %s37, 3
          %s783 = scalar_select %p782, %s37, 3
          %s784 = smul.addr %s783, 2
          %s785 = smul.addr %s784, 8
          %s786 = scalar_lea.vmem %s3, %s785
        $region112: #{vgrnn_forward.1} parent=95 // pred_fallthru
          _
      $region96: #{vgrnn_forward.1} parent=5 // pred_fallthru
        _
      %p787 = scmp.le.s32.totalorder 1, %s37
      %p788 = scmp.lt.s32.totalorder %s37, 5
      %p789 = pnand %p787, %p788
      %p790 = pneg %p789
      // Predicated region
      $region113: #{vgrnn_forward.1} parent=5 // pred_check
        _
      $region114: #{vgrnn_forward.1} parent=5 // pred_check_branch
        %792 = sbr.rel (%p789) target = $region116
      $region115: #{vgrnn_forward.1} parent=5 // pred_region
        %s793 = ssub.s32 %s37, 1
        %p794 = scmp.lt.s32.totalorder %s42, 3
        %s795 = scalar_select %p794, %s42, 3
        %s796 = smul.addr %s795, 2
        %s797 = smul.addr %s796, 8
        %s798 = scalar_lea.vmem %s0, %s797
        %p799 = pneg %p63
        %p800 = pneg %p60
        %p801 = scmp.lt.s32.totalorder %s42, 3
        %s802 = scalar_select %p801, %s42, 3
        %s803 = smul.addr %s802, 2
        %s804 = smul.addr %s803, 8
        %s805 = scalar_lea.vmem %s1, %s804
        %p806 = pneg %p89
        %p807 = pneg %p86
        %p808 = scmp.lt.s32.totalorder %s42, 3
        %s809 = scalar_select %p808, %s42, 3
        %s810 = smul.addr %s809, 2
        %s811 = smul.addr %s810, 8
        %s812 = scalar_lea.vmem %s2, %s811
        %p813 = pneg %p115
        %p814 = pneg %p112
        %p815 = scmp.lt.s32.totalorder %s42, 3
        %s816 = scalar_select %p815, %s42, 3
        %s817 = smul.addr %s816, 2
        %s818 = smul.addr %s817, 8
        %s819 = scalar_lea.vmem %s3, %s818
        %p820 = pneg %p141
        %p821 = pneg %p138
        %p822 = pneg %p162
        %p823 = pneg %p159
        %p824 = pneg %p183
        %p825 = pneg %p180
        %p826 = pneg %p204
        %p827 = pneg %p201
        %p828 = pneg %p225
        %p829 = pneg %p222
        %p830 = pneg %p246
        %p831 = pneg %p243
        %p832 = pneg %p267
        %p833 = pneg %p264
        %p834 = pneg %p288
        %p835 = pneg %p285
        %p836 = pneg %p309
        %p837 = pneg %p306
        %p838 = pneg %p330
        %p839 = pneg %p327
        %p840 = pneg %p351
        %p841 = pneg %p348
        %p842 = pneg %p372
        %p843 = pneg %p369
        %p844 = pneg %p393
        %p845 = pneg %p390
        %p846 = pneg %p414
        %p847 = pneg %p411
        %p848 = pneg %p435
        %p849 = pneg %p432
        %p850 = pneg %p456
        %p851 = pneg %p453
        %p852 = pneg %p477
        %p853 = pneg %p474
        %p854 = pneg %p498
        %p855 = pneg %p495
        %p856 = pneg %p519
        %p857 = pneg %p516
        %p858 = pneg %p540
        %p859 = pneg %p537
        %p860 = pneg %p561
        %p861 = pneg %p558
        %p862 = pneg %p587
        %p863 = pneg %p584
        %p864 = scmp.lt.s32.totalorder %s42, 3
        %s865 = scalar_select %p864, %s42, 3
        %s866 = smul.addr %s865, 2
        %s867 = smul.addr %s866, 8
        %s868 = scalar_lea.vmem %s24, %s867
        %p869 = pneg %p613
        %p870 = pneg %p610
        %p871 = scmp.lt.s32.totalorder %s42, 3
        %s872 = scalar_select %p871, %s42, 3
        %s873 = smul.addr %s872, 2
        %s874 = smul.addr %s873, 8
        %s875 = scalar_lea.vmem %s25, %s874
        %p876 = pneg %p634
        %p877 = pneg %p631
        %p878 = pneg %p655
        %p879 = pneg %p652
        %p880 = pneg %p676
        %p881 = pneg %p673
        %p882 = scmp.lt.s32.totalorder %s42, 3
        %s883 = scalar_select %p882, %s42, 3
        %s884 = smul.addr %s883, 2
        %s885 = smul.addr %s884, 8
        %s886 = scalar_lea.vmem %s0, %s885
        %p887 = scmp.lt.s32.totalorder %s42, 3
        %s888 = scalar_select %p887, %s42, 3
        %s889 = smul.addr %s888, 2
        %s890 = smul.addr %s889, 8
        %s891 = scalar_lea.vmem %s1, %s890
        %p892 = scmp.lt.s32.totalorder %s42, 3
        %s893 = scalar_select %p892, %s42, 3
        %s894 = smul.addr %s893, 2
        %s895 = smul.addr %s894, 8
        %s896 = scalar_lea.vmem %s2, %s895
        %p897 = scmp.lt.s32.totalorder %s42, 3
        %s898 = scalar_select %p897, %s42, 3
        %s899 = smul.addr %s898, 2
        %s900 = smul.addr %s899, 8
        %s901 = scalar_lea.vmem %s3, %s900
        %p902 = scmp.lt.s32.totalorder %s42, 3
        %s903 = scalar_select %p902, %s42, 3
        %s904 = smul.addr %s903, 2
        %s905 = smul.addr %s904, 8
        %s906 = scalar_lea.vmem %s24, %s905
        %p907 = scmp.lt.s32.totalorder %s42, 3
        %s908 = scalar_select %p907, %s42, 3
        %s909 = smul.addr %s908, 2
        %s910 = smul.addr %s909, 8
        %s911 = scalar_lea.vmem %s25, %s910
        %p912 = scmp.eq.s32.totalorder %s42, 0
        // Predicated region
        $region117: #{vgrnn_forward.1} parent=115 // pred_check
          %p913 = pneg %p912
        $region118: #{vgrnn_forward.1} parent=115 // pred_check_branch
          %915 = sbr.rel (%p913) target = $region120
        $region119: #{vgrnn_forward.1} parent=115 // pred_region
          %vm916 = vcmask 261120
          %917 = vst.msk [vmem:[#allocation2] sm:$0xff] %vm916, 0.0
          %918 = vst.msk [vmem:[#allocation2 + $0x8] sm:$0xff] %vm916, 0.0
          %919 = vst.msk [vmem:[#allocation2 + $0x10] sm:$0xff] %vm916, 0.0
          %920 = vst.msk [vmem:[#allocation2 + $0x18] sm:$0xff] %vm916, 0.0
          %vm921 = vcmask 0
          %922 = vst.msk [vmem:[#allocation4] sm:$0x1] %vm921, 0.0
          %923 = vst.msk [vmem:[#allocation6] sm:$0x1] %vm921, 0.0
        $region120: #{vgrnn_forward.1} parent=115 // pred_fallthru
          _
        %v924 = vld [vmem:[%s886] sm:$0xff]
        %v925 = vld [vmem:[%s886 + $0x8] sm:$0xff]
        %v926 = vld [vmem:[%s891] sm:$0xff]
        %v927 = vld [vmem:[%s891 + $0x8] sm:$0xff]
        %v928 = vld [vmem:[%s896] sm:$0xff]
        %v929 = vld [vmem:[%s896 + $0x8] sm:$0xff]
        %v930 = vld [vmem:[%s901] sm:$0xff]
        %v931 = vld [vmem:[%s901 + $0x8] sm:$0xff]
        %v932 = vld [vmem:[%s4] sm:$0xff]
        %v933 = vld [vmem:[%s5] sm:$0x1]
        %v935 = vperm.slane %v933, 0
        %vm937 = vcmask 64512
        %v939 = vsel %vm937, %v924, 0
        %v942 = vsel %vm937, %v925, 0
        %944 = vmatpush.msra.mxu0 0.0
        %945 = vmatpush.msra.mxu0 0.0
        %946 = vmatpush.msra.mxu0 0.0
        %947 = vmatpush.msra.mxu0 0.0
        %948 = vmatpush.msra.mxu0 0.0
        %949 = vmatpush.msra.mxu0 0.0
        %950 = vmatpush.msra.mxu0 0.0
        %951 = vmatpush.msra.mxu0 0.0
        %952 = vmatpush.msra.mxu0 0.0
        %953 = vmatpush.msra.mxu0 0.0
        %954 = vmatpush.msra.mxu0 0.0
        %955 = vmatpush.msra.mxu0 0.0
        %956 = vmatpush.msra.mxu0 0.0
        %957 = vmatpush.msra.mxu0 0.0
        %958 = vmatpush.msra.mxu0 0.0
        %959 = vmatpush.msra.mxu0 %v932
        %960 = vmatmul.f32.gmra.mxu0 %v939
        %v961 = vpop.f32.mrf.mxu0
        %v962 = vadd.f32 %v935, %v961
        %963 = vmatmul.f32.gmra.mxu0 %v942
        %v964 = vpop.f32.mrf.mxu0
        %v965 = vadd.f32 %v935, %v964
        %966 = vdwg.mxu0
        %v967 = vmax.f32 %v962, 0.0
        %v968 = vmax.f32 %v965, 0.0
        %v969 = vld [vmem:[#allocation2] sm:$0xff]
        %v970 = vld [vmem:[#allocation2 + $0x8] sm:$0xff]
        %s971 = scalar_lea.vmem [#allocation2], 16
        %v972 = vld [vmem:[%s971] sm:$0xff]
        %v973 = vld [vmem:[%s971 + $0x8] sm:$0xff]
        %vm974 = vcmask 130048
        %v976 = vsel %vm974, %v926, 0
        %v979 = vsel %vm974, %v927, 0
        %981 = vmatpush.msra.mxu0 0.0
        %982 = vmatpush.msra.mxu0 0.0
        %983 = vmatpush.msra.mxu0 0.0
        %984 = vmatpush.msra.mxu0 0.0
        %985 = vmatpush.msra.mxu0 0.0
        %986 = vmatpush.msra.mxu0 0.0
        %987 = vmatpush.msra.mxu0 0.0
        %988 = vmatpush.msra.mxu0 0.0
        %989 = vmatpush.msra.mxu0 0.0
        %990 = vmatpush.msra.mxu0 0.0
        %991 = vmatpush.msra.mxu0 0.0
        %992 = vmatpush.msra.mxu0 0.0
        %993 = vmatpush.msra.mxu0 0.0
        %994 = vmatpush.msra.mxu0 0.0
        %995 = vmatpush.msra.mxu0 %v968
        %996 = vmatpush.msra.mxu0 %v967
        %997 = vmatmul.f32.gmra.mxu0 %v976
        %v998 = vpop.f32.mrf.mxu0
        %v999 = vadd.f32 0.0, %v998
        %1000 = vmatmul.f32.gmra.mxu0 %v979
        %v1001 = vpop.f32.mrf.mxu0
        %v1002 = vadd.f32 0.0, %v1001
        %1003 = vdwg.mxu0
        %1004 = vmatpush.msra.mxu0 0.0
        %1005 = vmatpush.msra.mxu0 0.0
        %1006 = vmatpush.msra.mxu0 0.0
        %1007 = vmatpush.msra.mxu0 0.0
        %1008 = vmatpush.msra.mxu0 0.0
        %1009 = vmatpush.msra.mxu0 0.0
        %1010 = vmatpush.msra.mxu0 0.0
        %1011 = vmatpush.msra.mxu0 0.0
        %1012 = vmatpush.msra.mxu0 0.0
        %1013 = vmatpush.msra.mxu0 0.0
        %1014 = vmatpush.msra.mxu0 0.0
        %1015 = vmatpush.msra.mxu0 0.0
        %1016 = vmatpush.msra.mxu0 0.0
        %1017 = vmatpush.msra.mxu0 0.0
        %1018 = vmatpush.msra.mxu0 %v970
        %1019 = vmatpush.msra.mxu0 %v969
        %1020 = vmatmul.f32.gmra.mxu0 %v976
        %v1021 = vpop.f32.mrf.mxu0
        %v1022 = vadd.f32 0.0, %v1021
        %1023 = vmatmul.f32.gmra.mxu0 %v979
        %v1024 = vpop.f32.mrf.mxu0
        %v1025 = vadd.f32 0.0, %v1024
        %1026 = vdwg.mxu0
        %1027 = vmatpush.msra.mxu0 0.0
        %1028 = vmatpush.msra.mxu0 0.0
        %1029 = vmatpush.msra.mxu0 0.0
        %1030 = vmatpush.msra.mxu0 0.0
        %1031 = vmatpush.msra.mxu0 0.0
        %1032 = vmatpush.msra.mxu0 0.0
        %1033 = vmatpush.msra.mxu0 0.0
        %1034 = vmatpush.msra.mxu0 0.0
        %1035 = vmatpush.msra.mxu0 0.0
        %1036 = vmatpush.msra.mxu0 0.0
        %1037 = vmatpush.msra.mxu0 0.0
        %1038 = vmatpush.msra.mxu0 0.0
        %1039 = vmatpush.msra.mxu0 0.0
        %1040 = vmatpush.msra.mxu0 0.0
        %1041 = vmatpush.msra.mxu0 %v973
        %1042 = vmatpush.msra.mxu0 %v972
        %1043 = vmatmul.f32.gmra.mxu0 %v976
        %v1044 = vpop.f32.mrf.mxu0
        %v1045 = vadd.f32 0.0, %v1044
        %1046 = vmatmul.f32.gmra.mxu0 %v979
        %v1047 = vpop.f32.mrf.mxu0
        %v1048 = vadd.f32 0.0, %v1047
        %1049 = vdwg.mxu0
        %v1050 = vld [vmem:[%s8] sm:$0xff]
        %v1051 = vld [vmem:[%s8 + $0x8] sm:$0xff]
        %v1052 = vld [vmem:[%s8 + $0x10] sm:$0xff]
        %v1053 = vld [vmem:[%s8 + $0x18] sm:$0xff]
        %v1054 = vld [vmem:[%s9] sm:$0xff]
        %v1055 = vld [vmem:[%s9 + $0x8] sm:$0xff]
        %v1056 = vld [vmem:[%s9 + $0x10] sm:$0xff]
        %v1057 = vld [vmem:[%s9 + $0x18] sm:$0xff]
        %vm1058 = vcmask 261120
        %v1060 = vsel %vm1058, %v1045, 0
        %v1063 = vsel %vm1058, %v1048, 0
        %1065 = vmatpush.msra.mxu0 0.0
        %1066 = vmatpush.msra.mxu0 0.0
        %1067 = vmatpush.msra.mxu0 0.0
        %1068 = vmatpush.msra.mxu0 0.0
        %1069 = vmatpush.msra.mxu0 0.0
        %1070 = vmatpush.msra.mxu0 0.0
        %1071 = vmatpush.msra.mxu0 0.0
        %1072 = vmatpush.msra.mxu0 0.0
        %1073 = vmatpush.msra.mxu0 0.0
        %1074 = vmatpush.msra.mxu0 0.0
        %1075 = vmatpush.msra.mxu0 0.0
        %1076 = vmatpush.msra.mxu0 0.0
        %1077 = vmatpush.msra.mxu0 %v1057
        %1078 = vmatpush.msra.mxu0 %v1056
        %1079 = vmatpush.msra.mxu0 %v1055
        %1080 = vmatpush.msra.mxu0 %v1054
        %1081 = vmatmul.f32.gmra.mxu0 %v1060
        %v1082 = vpop.f32.mrf.mxu0
        %v1083 = vadd.f32 0.0, %v1082
        %1084 = vmatmul.f32.gmra.mxu0 %v1063
        %v1085 = vpop.f32.mrf.mxu0
        %v1086 = vadd.f32 0.0, %v1085
        %1087 = vdwg.mxu0
        %v1089 = vsel %vm1058, %v999, 0
        %v1092 = vsel %vm1058, %v1002, 0
        %1094 = vmatpush.msra.mxu0 0.0
        %1095 = vmatpush.msra.mxu0 0.0
        %1096 = vmatpush.msra.mxu0 0.0
        %1097 = vmatpush.msra.mxu0 0.0
        %1098 = vmatpush.msra.mxu0 0.0
        %1099 = vmatpush.msra.mxu0 0.0
        %1100 = vmatpush.msra.mxu0 0.0
        %1101 = vmatpush.msra.mxu0 0.0
        %1102 = vmatpush.msra.mxu0 0.0
        %1103 = vmatpush.msra.mxu0 0.0
        %1104 = vmatpush.msra.mxu0 0.0
        %1105 = vmatpush.msra.mxu0 0.0
        %1106 = vmatpush.msra.mxu0 %v1053
        %1107 = vmatpush.msra.mxu0 %v1052
        %1108 = vmatpush.msra.mxu0 %v1051
        %1109 = vmatpush.msra.mxu0 %v1050
        %1110 = vmatmul.f32.gmra.mxu0 %v1089
        %v1111 = vpop.f32.mrf.mxu0
        %v1112 = vadd.f32 %v1083, %v1111
        %1113 = vmatmul.f32.gmra.mxu0 %v1092
        %v1114 = vpop.f32.mrf.mxu0
        %v1115 = vadd.f32 %v1086, %v1114
        %1116 = vdwg.mxu0
        %v1117 = vld [vmem:[%s10] sm:$0x1]
        %v1119 = vperm.slane %v1117, 0
        %v1121 = vadd.f32 %v1112, %v1119
        %v1122 = vadd.f32 %v1115, %v1119
        %v1123 = vmax.f32 %v1121, 0.0
        %v1124 = vmax.f32 %v1122, 0.0
        %1125 = vmatpush.msra.mxu0 0.0
        %1126 = vmatpush.msra.mxu0 0.0
        %1127 = vmatpush.msra.mxu0 0.0
        %1128 = vmatpush.msra.mxu0 0.0
        %1129 = vmatpush.msra.mxu0 0.0
        %1130 = vmatpush.msra.mxu0 0.0
        %1131 = vmatpush.msra.mxu0 0.0
        %1132 = vmatpush.msra.mxu0 0.0
        %1133 = vmatpush.msra.mxu0 0.0
        %1134 = vmatpush.msra.mxu0 0.0
        %1135 = vmatpush.msra.mxu0 0.0
        %1136 = vmatpush.msra.mxu0 0.0
        %1137 = vmatpush.msra.mxu0 0.0
        %1138 = vmatpush.msra.mxu0 0.0
        %1139 = vmatpush.msra.mxu0 %v1124
        %1140 = vmatpush.msra.mxu0 %v1123
        %1141 = vmatmul.f32.gmra.mxu0 %v976
        %v1142 = vpop.f32.mrf.mxu0
        %v1143 = vadd.f32 0.0, %v1142
        %1144 = vmatmul.f32.gmra.mxu0 %v979
        %v1145 = vpop.f32.mrf.mxu0
        %v1146 = vadd.f32 0.0, %v1145
        %1147 = vdwg.mxu0
        %v1148 = vld [vmem:[%s11] sm:$0xff]
        %v1149 = vld [vmem:[%s11 + $0x8] sm:$0xff]
        %v1150 = vld [vmem:[%s11 + $0x10] sm:$0xff]
        %v1151 = vld [vmem:[%s11 + $0x18] sm:$0xff]
        %v1152 = vld [vmem:[%s12] sm:$0x1]
        %v1154 = vperm.slane %v1152, 0
        %v1157 = vsel %vm1058, %v1143, 0
        %v1160 = vsel %vm1058, %v1146, 0
        %1162 = vmatpush.msra.mxu0 0.0
        %1163 = vmatpush.msra.mxu0 0.0
        %1164 = vmatpush.msra.mxu0 0.0
        %1165 = vmatpush.msra.mxu0 0.0
        %1166 = vmatpush.msra.mxu0 0.0
        %1167 = vmatpush.msra.mxu0 0.0
        %1168 = vmatpush.msra.mxu0 0.0
        %1169 = vmatpush.msra.mxu0 0.0
        %1170 = vmatpush.msra.mxu0 0.0
        %1171 = vmatpush.msra.mxu0 0.0
        %1172 = vmatpush.msra.mxu0 0.0
        %1173 = vmatpush.msra.mxu0 0.0
        %1174 = vmatpush.msra.mxu0 %v1151
        %1175 = vmatpush.msra.mxu0 %v1150
        %1176 = vmatpush.msra.mxu0 %v1149
        %1177 = vmatpush.msra.mxu0 %v1148
        %1178 = vmatmul.f32.gmra.mxu0 %v1157
        %v1179 = vpop.f32.mrf.mxu0
        %v1180 = vadd.f32 %v1154, %v1179
        %1181 = vmatmul.f32.gmra.mxu0 %v1160
        %v1182 = vpop.f32.mrf.mxu0
        %v1183 = vadd.f32 %v1154, %v1182
        %1184 = vdwg.mxu0
        %v1185 = vmax.f32 %v1180, 0.0
        %v1186 = vmax.f32 %v1183, 0.0
        %v1187 = vmax.f32 %v1185, 0.0
        %v1188 = vmax.f32 %v1186, 0.0
        %v1189 = vand.u32 2147483647, %v1185
        %v1190 = vand.u32 2147483647, %v1186
        %v1191 = vsub.f32 0.0, %v1189
        %v1192 = vsub.f32 0.0, %v1190
        %v1193 = vmul.f32 %v1191, 1.442695
        %v1194 = vpow.pop %v1193
        %v1195 = vmul.f32 %v1192, 1.442695
        %v1196 = vpow.pop %v1195
        %v1197 = vadd.f32 %v1194, 1.0
        %v1198 = vadd.f32 %v1196, 1.0
        %v1199 = vlog2.pop %v1197
        %v1200 = vmul.f32 %v1199, 0.6931472
        %v1201 = vlog2.pop %v1198
        %v1202 = vmul.f32 %v1201, 0.6931472
        %v1203 = vadd.f32 %v1187, %v1200
        %v1204 = vadd.f32 %v1188, %v1202
        %v1205 = vld [vmem:[%s13] sm:$0xff]
        %v1206 = vld [vmem:[%s13 + $0x8] sm:$0xff]
        %v1207 = vld [vmem:[%s13 + $0x10] sm:$0xff]
        %v1208 = vld [vmem:[%s13 + $0x18] sm:$0xff]
        %v1209 = vld [vmem:[%s14] sm:$0x1]
        %v1211 = vperm.slane %v1209, 0
        %v1214 = vsel %vm1058, %v972, 0
        %v1217 = vsel %vm1058, %v973, 0
        %1219 = vmatpush.msra.mxu0 0.0
        %1220 = vmatpush.msra.mxu0 0.0
        %1221 = vmatpush.msra.mxu0 0.0
        %1222 = vmatpush.msra.mxu0 0.0
        %1223 = vmatpush.msra.mxu0 0.0
        %1224 = vmatpush.msra.mxu0 0.0
        %1225 = vmatpush.msra.mxu0 0.0
        %1226 = vmatpush.msra.mxu0 0.0
        %1227 = vmatpush.msra.mxu0 0.0
        %1228 = vmatpush.msra.mxu0 0.0
        %1229 = vmatpush.msra.mxu0 0.0
        %1230 = vmatpush.msra.mxu0 0.0
        %1231 = vmatpush.msra.mxu0 %v1208
        %1232 = vmatpush.msra.mxu0 %v1207
        %1233 = vmatpush.msra.mxu0 %v1206
        %1234 = vmatpush.msra.mxu0 %v1205
        %1235 = vmatmul.f32.gmra.mxu0 %v1214
        %v1236 = vpop.f32.mrf.mxu0
        %v1237 = vadd.f32 %v1211, %v1236
        %1238 = vmatmul.f32.gmra.mxu0 %v1217
        %v1239 = vpop.f32.mrf.mxu0
        %v1240 = vadd.f32 %v1211, %v1239
        %1241 = vdwg.mxu0
        %v1242 = vmax.f32 %v1237, 0.0
        %v1243 = vmax.f32 %v1240, 0.0
        %v1244 = vld [vmem:[%s15] sm:$0xff]
        %v1245 = vld [vmem:[%s15 + $0x8] sm:$0xff]
        %v1246 = vld [vmem:[%s15 + $0x10] sm:$0xff]
        %v1247 = vld [vmem:[%s15 + $0x18] sm:$0xff]
        %v1248 = vld [vmem:[%s16] sm:$0x1]
        %v1250 = vperm.slane %v1248, 0
        %v1253 = vsel %vm1058, %v1242, 0
        %v1256 = vsel %vm1058, %v1243, 0
        %1258 = vmatpush.msra.mxu0 0.0
        %1259 = vmatpush.msra.mxu0 0.0
        %1260 = vmatpush.msra.mxu0 0.0
        %1261 = vmatpush.msra.mxu0 0.0
        %1262 = vmatpush.msra.mxu0 0.0
        %1263 = vmatpush.msra.mxu0 0.0
        %1264 = vmatpush.msra.mxu0 0.0
        %1265 = vmatpush.msra.mxu0 0.0
        %1266 = vmatpush.msra.mxu0 0.0
        %1267 = vmatpush.msra.mxu0 0.0
        %1268 = vmatpush.msra.mxu0 0.0
        %1269 = vmatpush.msra.mxu0 0.0
        %1270 = vmatpush.msra.mxu0 %v1247
        %1271 = vmatpush.msra.mxu0 %v1246
        %1272 = vmatpush.msra.mxu0 %v1245
        %1273 = vmatpush.msra.mxu0 %v1244
        %1274 = vmatmul.f32.gmra.mxu0 %v1253
        %v1275 = vpop.f32.mrf.mxu0
        %v1276 = vadd.f32 %v1250, %v1275
        %1277 = vmatmul.f32.gmra.mxu0 %v1256
        %v1278 = vpop.f32.mrf.mxu0
        %v1279 = vadd.f32 %v1250, %v1278
        %1280 = vdwg.mxu0
        %v1281 = vmax.f32 %v1276, 0.0
        %v1282 = vmax.f32 %v1279, 0.0
        %v1283 = vand.u32 2147483647, %v1276
        %v1284 = vand.u32 2147483647, %v1279
        %v1285 = vsub.f32 0.0, %v1283
        %v1286 = vsub.f32 0.0, %v1284
        %v1287 = vmul.f32 %v1285, 1.442695
        %v1288 = vpow.pop %v1287
        %v1289 = vmul.f32 %v1286, 1.442695
        %v1290 = vpow.pop %v1289
        %v1291 = vadd.f32 %v1288, 1.0
        %v1292 = vadd.f32 %v1290, 1.0
        %v1293 = vlog2.pop %v1291
        %v1294 = vmul.f32 %v1293, 0.6931472
        %v1295 = vlog2.pop %v1292
        %v1296 = vmul.f32 %v1295, 0.6931472
        %v1297 = vadd.f32 %v1281, %v1294
        %v1298 = vadd.f32 %v1282, %v1296
        %1301 = vrot.lane.b32.xlu0 %v1203, 112
        %v1302 = vpop.permute.xlu0 %1301
        %1303 = vrot.lane.b32.xlu0 %v1204, 112
        %v1304 = vpop.permute.xlu0 %1303
        %v1307 = vmul.f32 %v930, %v1302
        %v1308 = vmul.f32 %v931, %v1304
        %v1309 = vadd.f32 %v1307, %v1185
        %v1310 = vadd.f32 %v1308, %v1186
        %v1311 = vld [vmem:[%s6] sm:$0xff]
        %v1312 = vld [vmem:[%s6 + $0x8] sm:$0xff]
        %v1313 = vld [vmem:[%s7] sm:$0x1]
        %v1315 = vperm.slane %v1313, 0
        %v1318 = vsel %vm974, %v1309, 0
        %v1321 = vsel %vm974, %v1310, 0
        %1323 = vmatpush.msra.mxu0 0.0
        %1324 = vmatpush.msra.mxu0 0.0
        %1325 = vmatpush.msra.mxu0 0.0
        %1326 = vmatpush.msra.mxu0 0.0
        %1327 = vmatpush.msra.mxu0 0.0
        %1328 = vmatpush.msra.mxu0 0.0
        %1329 = vmatpush.msra.mxu0 0.0
        %1330 = vmatpush.msra.mxu0 0.0
        %1331 = vmatpush.msra.mxu0 0.0
        %1332 = vmatpush.msra.mxu0 0.0
        %1333 = vmatpush.msra.mxu0 0.0
        %1334 = vmatpush.msra.mxu0 0.0
        %1335 = vmatpush.msra.mxu0 0.0
        %1336 = vmatpush.msra.mxu0 0.0
        %1337 = vmatpush.msra.mxu0 %v1312
        %1338 = vmatpush.msra.mxu0 %v1311
        %1339 = vmatmul.f32.gmra.mxu0 %v1318
        %v1340 = vpop.f32.mrf.mxu0
        %v1341 = vadd.f32 %v1315, %v1340
        %1342 = vmatmul.f32.gmra.mxu0 %v1321
        %v1343 = vpop.f32.mrf.mxu0
        %v1344 = vadd.f32 %v1315, %v1343
        %1345 = vdwg.mxu0
        %v1346 = vmax.f32 %v1341, 0.0
        %v1347 = vmax.f32 %v1344, 0.0
        %1348 = vmatpush.xpose.msra.mxu0 0.0
        %1349 = vmatpush.xpose.msra.mxu0 0.0
        %1350 = vmatpush.xpose.msra.mxu0 0.0
        %1351 = vmatpush.xpose.msra.mxu0 0.0
        %1352 = vmatpush.xpose.msra.mxu0 0.0
        %1353 = vmatpush.xpose.msra.mxu0 0.0
        %1354 = vmatpush.xpose.msra.mxu0 0.0
        %1355 = vmatpush.xpose.msra.mxu0 0.0
        %1356 = vmatpush.xpose.msra.mxu0 0.0
        %1357 = vmatpush.xpose.msra.mxu0 0.0
        %1358 = vmatpush.xpose.msra.mxu0 0.0
        %1359 = vmatpush.xpose.msra.mxu0 0.0
        %1360 = vmatpush.xpose.msra.mxu0 0.0
        %1361 = vmatpush.xpose.msra.mxu0 0.0
        %1362 = vmatpush.xpose.msra.mxu0 %v1321
        %1363 = vmatpush.xpose.msra.mxu0 %v1318
        %1364 = vmatmul.f32.gmra.mxu0 %v1318
        %v1365 = vpop.f32.mrf.mxu0
        %v1366 = vadd.f32 0.0, %v1365
        %1367 = vmatmul.f32.gmra.mxu0 %v1321
        %v1368 = vpop.f32.mrf.mxu0
        %v1369 = vadd.f32 0.0, %v1368
        %1370 = vdwg.mxu0
        %v1371 = vsub.f32 0.0, %v1366
        %v1372 = vsub.f32 0.0, %v1369
        %v1373 = vmul.f32 %v1371, 1.442695
        %v1374 = vpow.pop %v1373
        %v1375 = vmul.f32 %v1372, 1.442695
        %v1376 = vpow.pop %v1375
        %v1377 = vadd.f32 %v1374, 1.0
        %v1378 = vadd.f32 %v1376, 1.0
        %v1379 = vrcp.pop %v1377
        %v1380 = vrcp.pop %v1378
        %v1381 = vsel %vm974, %v928, 0.0
        %1382 = vadd.xlane.f32.xlu0 %v1381
        %v1383 = vpop.xlane.xlu0 %1382
        %v1384 = vsel %vm974, %v929, 0.0
        %1385 = vadd.xlane.f32.xlu0 %v1384
        %v1386 = vpop.xlane.xlu0 %1385
        %v1387 = vadd.f32 %v1383, %v1386
        %v1388 = vrot.slane %v1387, 4
        %v1389 = vadd.f32 %v1387, %v1388
        %v1390 = vrot.slane %v1389, 2
        %v1391 = vadd.f32 %v1389, %v1390
        %v1392 = vrot.slane %v1391, 1
        %v1393 = vadd.f32 %v1391, %v1392
        %v1394 = vsub.f32 256.0, %v1393
        %v1395 = vrcp.pop %v1393
        %v1396 = vmul.f32 %v1393, %v1395
        %v1397 = vsub.f32 1.0, %v1396
        %v1398 = vmul.f32 %v1395, %v1397
        %v1399 = vadd.f32 %v1395, %v1398
        %vm1400 = vweird.f32 %v1393
        %vm1401 = vweird.f32 %v1395
        %vm1402 = vmor %vm1400, %vm1401
        %v1403 = vsel %vm1402, %v1395, %v1399
        %v1404 = vand.u32 2147483647, %v1393
        %vm1405 = vcmp.eq.f32.partialorder %v1404, 8.507059e+37
        %v1406 = vand.u32 %v1393, 2147483648
        %v1407 = vor.u32 1.1754944e-38, %v1406
        %v1408 = vsel %vm1405, %v1407, %v1403
        %v1409 = vmul.f32 %v1394, %v1408
        %v1410 = vmul.f32 %v1394, 2.0
        %v1411 = vrcp.pop %v1410
        %v1412 = vmul.f32 %v1410, %v1411
        %v1413 = vsub.f32 1.0, %v1412
        %v1414 = vmul.f32 %v1411, %v1413
        %v1415 = vadd.f32 %v1411, %v1414
        %vm1416 = vweird.f32 %v1410
        %vm1417 = vweird.f32 %v1411
        %vm1418 = vmor %vm1416, %vm1417
        %v1419 = vsel %vm1418, %v1411, %v1415
        %v1420 = vand.u32 2147483647, %v1410
        %vm1421 = vcmp.eq.f32.partialorder %v1420, 8.507059e+37
        %v1422 = vand.u32 %v1410, 2147483648
        %v1423 = vor.u32 1.1754944e-38, %v1422
        %v1424 = vsel %vm1421, %v1423, %v1419
        %v1425 = vmul.f32 256.0, %v1424
        %v1426 = vsub.f32 %v1409, 1.0
        %v1427 = vmul.f32 %v1426, %v928
        %v1428 = vmul.f32 %v1426, %v929
        %v1429 = vadd.f32 %v1427, 1.0
        %v1430 = vadd.f32 %v1428, 1.0
        %v1431 = vsub.f32 1.0, %v928
        %v1432 = vsub.f32 1.0, %v929
        %v1433 = vmul.f32 %v1431, %v1379
        %v1434 = vmul.f32 %v1432, %v1380
        %v1435 = vand.u32 2147483647, %v1379
        %v1436 = vand.u32 2147483647, %v1380
        %v1437 = vsub.f32 0.0, %v1435
        %v1438 = vsub.f32 0.0, %v1436
        %v1439 = vmul.f32 %v1437, 1.442695
        %v1440 = vpow.pop %v1439
        %v1441 = vmul.f32 %v1438, 1.442695
        %v1442 = vpow.pop %v1441
        %v1443 = vadd.f32 %v1440, 1.0
        %v1444 = vadd.f32 %v1442, 1.0
        %v1445 = vlog2.pop %v1443
        %v1446 = vmul.f32 %v1445, 0.6931472
        %v1447 = vlog2.pop %v1444
        %v1448 = vmul.f32 %v1447, 0.6931472
        %v1449 = vsub.f32 0.0, %v1379
        %v1450 = vsub.f32 0.0, %v1380
        %v1451 = vmax.f32 %v1449, 0.0
        %v1452 = vmax.f32 %v1450, 0.0
        %v1453 = vadd.f32 %v1446, %v1451
        %v1454 = vadd.f32 %v1448, %v1452
        %v1455 = vmul.f32 %v1429, %v1453
        %v1456 = vmul.f32 %v1430, %v1454
        %v1457 = vadd.f32 %v1433, %v1455
        %v1458 = vadd.f32 %v1434, %v1456
        %v1459 = vsel %vm974, %v1457, 0.0
        %1460 = vadd.xlane.f32.xlu0 %v1459
        %v1461 = vpop.xlane.xlu0 %1460
        %v1462 = vsel %vm974, %v1458, 0.0
        %1463 = vadd.xlane.f32.xlu0 %v1462
        %v1464 = vpop.xlane.xlu0 %1463
        %v1465 = vadd.f32 %v1461, %v1464
        %v1466 = vrot.slane %v1465, 4
        %v1467 = vadd.f32 %v1465, %v1466
        %v1468 = vrot.slane %v1467, 2
        %v1469 = vadd.f32 %v1467, %v1468
        %v1470 = vrot.slane %v1469, 1
        %v1471 = vadd.f32 %v1469, %v1470
        %v1472 = vrcp.pop 256.0
        %v1473 = vmul.f32 256.0, %v1472
        %v1474 = vsub.f32 1.0, %v1473
        %v1475 = vmul.f32 %v1472, %v1474
        %v1476 = vadd.f32 %v1472, %v1475
        %vm1477 = vweird.f32 %v1472
        %v1478 = vsel %vm1477, %v1472, %v1476
        %v1479 = vmul.f32 %v1471, %v1478
        %v1480 = vmul.f32 %v1425, %v1479
        %v1481 = vadd.f32 %v1203, 1e-10
        %v1482 = vadd.f32 %v1204, 1e-10
        %v1483 = vadd.f32 %v1297, 1e-10
        %v1484 = vadd.f32 %v1298, 1e-10
        %v1485 = vsub.f32 %v1185, %v1276
        %v1486 = vsub.f32 %v1186, %v1279
        %v1487 = vlog2.pop %v1483
        %v1488 = vmul.f32 %v1487, 0.6931472
        %v1489 = vlog2.pop %v1484
        %v1490 = vmul.f32 %v1489, 0.6931472
        %v1491 = vmul.f32 %v1488, 2.0
        %v1492 = vmul.f32 %v1490, 2.0
        %v1493 = vlog2.pop %v1481
        %v1494 = vmul.f32 %v1493, 0.6931472
        %v1495 = vlog2.pop %v1482
        %v1496 = vmul.f32 %v1495, 0.6931472
        %v1497 = vmul.f32 %v1494, 2.0
        %v1498 = vmul.f32 %v1496, 2.0
        %v1499 = vsub.f32 %v1491, %v1497
        %v1500 = vsub.f32 %v1492, %v1498
        %v1501 = vmul.f32 %v1481, %v1481
        %v1502 = vmul.f32 %v1482, %v1482
        %v1503 = vmul.f32 %v1485, %v1485
        %v1504 = vmul.f32 %v1486, %v1486
        %1507 = vrot.lane.b32.xlu0 %v1503, 16
        %v1508 = vpop.permute.xlu0 %1507
        %1509 = vrot.lane.b32.xlu0 %v1504, 16
        %v1510 = vpop.permute.xlu0 %1509
        %v1513 = vadd.f32 %v1501, %v1508
        %v1514 = vadd.f32 %v1502, %v1510
        %v1515 = vmul.f32 %v1483, %v1483
        %v1516 = vmul.f32 %v1484, %v1484
        %v1517 = vrcp.pop %v1515
        %v1518 = vmul.f32 %v1515, %v1517
        %v1519 = vsub.f32 1.0, %v1518
        %v1520 = vmul.f32 %v1517, %v1519
        %v1521 = vadd.f32 %v1517, %v1520
        %vm1522 = vweird.f32 %v1515
        %vm1523 = vweird.f32 %v1517
        %vm1524 = vmor %vm1522, %vm1523
        %v1525 = vsel %vm1524, %v1517, %v1521
        %v1526 = vand.u32 2147483647, %v1515
        %vm1527 = vcmp.eq.f32.partialorder %v1526, 8.507059e+37
        %v1528 = vand.u32 %v1515, 2147483648
        %v1529 = vor.u32 1.1754944e-38, %v1528
        %v1530 = vsel %vm1527, %v1529, %v1525
        %v1531 = vmul.f32 %v1513, %v1530
        %v1532 = vrcp.pop %v1516
        %v1533 = vmul.f32 %v1516, %v1532
        %v1534 = vsub.f32 1.0, %v1533
        %v1535 = vmul.f32 %v1532, %v1534
        %v1536 = vadd.f32 %v1532, %v1535
        %vm1537 = vweird.f32 %v1516
        %vm1538 = vweird.f32 %v1532
        %vm1539 = vmor %vm1537, %vm1538
        %v1540 = vsel %vm1539, %v1532, %v1536
        %v1541 = vand.u32 2147483647, %v1516
        %vm1542 = vcmp.eq.f32.partialorder %v1541, 8.507059e+37
        %v1543 = vand.u32 %v1516, 2147483648
        %v1544 = vor.u32 1.1754944e-38, %v1543
        %v1545 = vsel %vm1542, %v1544, %v1540
        %v1546 = vmul.f32 %v1514, %v1545
        %v1547 = vadd.f32 %v1499, %v1531
        %v1548 = vadd.f32 %v1500, %v1546
        %v1549 = vsub.f32 %v1547, 1.0
        %v1550 = vsub.f32 %v1548, 1.0
        %1553 = vrot.lane.b32.xlu0 %v1549, 112
        %v1554 = vpop.permute.xlu0 %1553
        %1555 = vrot.lane.b32.xlu0 %v1550, 112
        %v1556 = vpop.permute.xlu0 %1555
        %v1559 = vsel %vm974, %v1554, 0.0
        %1560 = vadd.xlane.f32.xlu0 %v1559
        %v1561 = vpop.xlane.xlu0 %1560
        %v1562 = vsel %vm974, %v1556, 0.0
        %1563 = vadd.xlane.f32.xlu0 %v1562
        %v1564 = vpop.xlane.xlu0 %1563
        %v1565 = vadd.f32 %v1561, %v1564
        %v1566 = vrot.slane %v1565, 4
        %v1567 = vadd.f32 %v1565, %v1566
        %v1568 = vrot.slane %v1567, 2
        %v1569 = vadd.f32 %v1567, %v1568
        %v1570 = vrot.slane %v1569, 1
        %v1571 = vadd.f32 %v1569, %v1570
        %v1572 = vmul.f32 %v1571, 0.5
        %v1573 = vmul.f32 %v1572, %v1478
        %v1574 = vld [vmem:[#allocation4] sm:$0x1]
        %v1575 = vadd.f32 %v1574, %v1573
        %vm1576 = vcmask 0
        %1577 = vst.msk [vmem:[#allocation4] sm:$0x1] %vm1576, %v1575
        %v1578 = vld [vmem:[#allocation6] sm:$0x1]
        %v1579 = vadd.f32 %v1578, %v1480
        %1580 = vst.msk [vmem:[#allocation6] sm:$0x1] %vm1576, %v1579
        %1581 = vmatpush.msra.mxu0 0.0
        %1582 = vmatpush.msra.mxu0 0.0
        %1583 = vmatpush.msra.mxu0 0.0
        %1584 = vmatpush.msra.mxu0 0.0
        %1585 = vmatpush.msra.mxu0 0.0
        %1586 = vmatpush.msra.mxu0 0.0
        %1587 = vmatpush.msra.mxu0 0.0
        %1588 = vmatpush.msra.mxu0 0.0
        %1589 = vmatpush.msra.mxu0 0.0
        %1590 = vmatpush.msra.mxu0 0.0
        %1591 = vmatpush.msra.mxu0 0.0
        %1592 = vmatpush.msra.mxu0 0.0
        %1593 = vmatpush.msra.mxu0 0.0
        %1594 = vmatpush.msra.mxu0 0.0
        %1595 = vmatpush.msra.mxu0 %v1347
        %1596 = vmatpush.msra.mxu0 %v1346
        %1597 = vmatmul.f32.gmra.mxu0 %v976
        %v1598 = vpop.f32.mrf.mxu0
        %v1599 = vadd.f32 0.0, %v1598
        %1600 = vmatmul.f32.gmra.mxu0 %v979
        %v1601 = vpop.f32.mrf.mxu0
        %v1602 = vadd.f32 0.0, %v1601
        %1603 = vdwg.mxu0
        %v1604 = vld [vmem:[%s17] sm:$0xff]
        %v1605 = vld [vmem:[%s17 + $0x8] sm:$0xff]
        %v1606 = vld [vmem:[%s17 + $0x10] sm:$0xff]
        %v1607 = vld [vmem:[%s17 + $0x18] sm:$0xff]
        %v1608 = vld [vmem:[%s18] sm:$0xff]
        %v1609 = vld [vmem:[%s18 + $0x8] sm:$0xff]
        %v1610 = vld [vmem:[%s18 + $0x10] sm:$0xff]
        %v1611 = vld [vmem:[%s18 + $0x18] sm:$0xff]
        %v1613 = vsel %vm1058, %v1599, 0
        %v1616 = vsel %vm1058, %v1602, 0
        %1618 = vmatpush.msra.mxu0 0.0
        %1619 = vmatpush.msra.mxu0 0.0
        %1620 = vmatpush.msra.mxu0 0.0
        %1621 = vmatpush.msra.mxu0 0.0
        %1622 = vmatpush.msra.mxu0 0.0
        %1623 = vmatpush.msra.mxu0 0.0
        %1624 = vmatpush.msra.mxu0 0.0
        %1625 = vmatpush.msra.mxu0 0.0
        %1626 = vmatpush.msra.mxu0 0.0
        %1627 = vmatpush.msra.mxu0 0.0
        %1628 = vmatpush.msra.mxu0 0.0
        %1629 = vmatpush.msra.mxu0 0.0
        %1630 = vmatpush.msra.mxu0 %v1611
        %1631 = vmatpush.msra.mxu0 %v1610
        %1632 = vmatpush.msra.mxu0 %v1609
        %1633 = vmatpush.msra.mxu0 %v1608
        %1634 = vmatmul.f32.gmra.mxu0 %v1613
        %v1635 = vpop.f32.mrf.mxu0
        %v1636 = vadd.f32 0.0, %v1635
        %1637 = vmatmul.f32.gmra.mxu0 %v1616
        %v1638 = vpop.f32.mrf.mxu0
        %v1639 = vadd.f32 0.0, %v1638
        %1640 = vdwg.mxu0
        %1641 = vmatpush.msra.mxu0 0.0
        %1642 = vmatpush.msra.mxu0 0.0
        %1643 = vmatpush.msra.mxu0 0.0
        %1644 = vmatpush.msra.mxu0 0.0
        %1645 = vmatpush.msra.mxu0 0.0
        %1646 = vmatpush.msra.mxu0 0.0
        %1647 = vmatpush.msra.mxu0 0.0
        %1648 = vmatpush.msra.mxu0 0.0
        %1649 = vmatpush.msra.mxu0 0.0
        %1650 = vmatpush.msra.mxu0 0.0
        %1651 = vmatpush.msra.mxu0 0.0
        %1652 = vmatpush.msra.mxu0 0.0
        %1653 = vmatpush.msra.mxu0 %v1607
        %1654 = vmatpush.msra.mxu0 %v1606
        %1655 = vmatpush.msra.mxu0 %v1605
        %1656 = vmatpush.msra.mxu0 %v1604
        %1657 = vmatmul.f32.gmra.mxu0 %v1089
        %v1658 = vpop.f32.mrf.mxu0
        %v1659 = vadd.f32 %v1636, %v1658
        %1660 = vmatmul.f32.gmra.mxu0 %v1092
        %v1661 = vpop.f32.mrf.mxu0
        %v1662 = vadd.f32 %v1639, %v1661
        %1663 = vdwg.mxu0
        %v1664 = vld [vmem:[%s19] sm:$0xff]
        %v1665 = vld [vmem:[%s19 + $0x8] sm:$0xff]
        %v1666 = vld [vmem:[%s19 + $0x10] sm:$0xff]
        %v1667 = vld [vmem:[%s19 + $0x18] sm:$0xff]
        %v1669 = vsel %vm1058, %v1022, 0
        %v1672 = vsel %vm1058, %v1025, 0
        %1674 = vmatpush.msra.mxu0 0.0
        %1675 = vmatpush.msra.mxu0 0.0
        %1676 = vmatpush.msra.mxu0 0.0
        %1677 = vmatpush.msra.mxu0 0.0
        %1678 = vmatpush.msra.mxu0 0.0
        %1679 = vmatpush.msra.mxu0 0.0
        %1680 = vmatpush.msra.mxu0 0.0
        %1681 = vmatpush.msra.mxu0 0.0
        %1682 = vmatpush.msra.mxu0 0.0
        %1683 = vmatpush.msra.mxu0 0.0
        %1684 = vmatpush.msra.mxu0 0.0
        %1685 = vmatpush.msra.mxu0 0.0
        %1686 = vmatpush.msra.mxu0 %v1667
        %1687 = vmatpush.msra.mxu0 %v1666
        %1688 = vmatpush.msra.mxu0 %v1665
        %1689 = vmatpush.msra.mxu0 %v1664
        %1690 = vmatmul.f32.gmra.mxu0 %v1669
        %v1691 = vpop.f32.mrf.mxu0
        %v1692 = vadd.f32 0.0, %v1691
        %1693 = vmatmul.f32.gmra.mxu0 %v1672
        %v1694 = vpop.f32.mrf.mxu0
        %v1695 = vadd.f32 0.0, %v1694
        %1696 = vdwg.mxu0
        %v1697 = vadd.f32 %v1659, %v1692
        %v1698 = vadd.f32 %v1662, %v1695
        %v1699 = vsub.f32 0.0, %v1697
        %v1700 = vsub.f32 0.0, %v1698
        %v1701 = vmul.f32 %v1699, 1.442695
        %v1702 = vpow.pop %v1701
        %v1703 = vmul.f32 %v1700, 1.442695
        %v1704 = vpow.pop %v1703
        %v1705 = vadd.f32 %v1702, 1.0
        %v1706 = vadd.f32 %v1704, 1.0
        %v1707 = vrcp.pop %v1705
        %v1708 = vrcp.pop %v1706
        %1711 = vrot.lane.b32.xlu0 %v969, 32
        %v1712 = vpop.permute.xlu0 %1711
        %1713 = vrot.lane.b32.xlu0 %v970, 32
        %v1714 = vpop.permute.xlu0 %1713
        %v1717 = vmul.f32 %v1707, %v1712
        %v1718 = vmul.f32 %v1708, %v1714
        %1721 = vrot.lane.b32.xlu0 %v1717, 96
        %v1722 = vpop.permute.xlu0 %1721
        %1723 = vrot.lane.b32.xlu0 %v1718, 96
        %v1724 = vpop.permute.xlu0 %1723
        %1727 = vmatpush.msra.mxu0 0.0
        %1728 = vmatpush.msra.mxu0 0.0
        %1729 = vmatpush.msra.mxu0 0.0
        %1730 = vmatpush.msra.mxu0 0.0
        %1731 = vmatpush.msra.mxu0 0.0
        %1732 = vmatpush.msra.mxu0 0.0
        %1733 = vmatpush.msra.mxu0 0.0
        %1734 = vmatpush.msra.mxu0 0.0
        %1735 = vmatpush.msra.mxu0 0.0
        %1736 = vmatpush.msra.mxu0 0.0
        %1737 = vmatpush.msra.mxu0 0.0
        %1738 = vmatpush.msra.mxu0 0.0
        %1739 = vmatpush.msra.mxu0 0.0
        %1740 = vmatpush.msra.mxu0 0.0
        %1741 = vmatpush.msra.mxu0 %v1724
        %1742 = vmatpush.msra.mxu0 %v1722
        %1743 = vmatmul.f32.gmra.mxu0 %v976
        %v1744 = vpop.f32.mrf.mxu0
        %v1745 = vadd.f32 0.0, %v1744
        %1746 = vmatmul.f32.gmra.mxu0 %v979
        %v1747 = vpop.f32.mrf.mxu0
        %v1748 = vadd.f32 0.0, %v1747
        %1749 = vdwg.mxu0
        %v1750 = vld [vmem:[%s20] sm:$0xff]
        %v1751 = vld [vmem:[%s20 + $0x8] sm:$0xff]
        %v1752 = vld [vmem:[%s20 + $0x10] sm:$0xff]
        %v1753 = vld [vmem:[%s20 + $0x18] sm:$0xff]
        %v1755 = vsel %vm1058, %v1745, 0
        %v1758 = vsel %vm1058, %v1748, 0
        %1760 = vmatpush.msra.mxu0 0.0
        %1761 = vmatpush.msra.mxu0 0.0
        %1762 = vmatpush.msra.mxu0 0.0
        %1763 = vmatpush.msra.mxu0 0.0
        %1764 = vmatpush.msra.mxu0 0.0
        %1765 = vmatpush.msra.mxu0 0.0
        %1766 = vmatpush.msra.mxu0 0.0
        %1767 = vmatpush.msra.mxu0 0.0
        %1768 = vmatpush.msra.mxu0 0.0
        %1769 = vmatpush.msra.mxu0 0.0
        %1770 = vmatpush.msra.mxu0 0.0
        %1771 = vmatpush.msra.mxu0 0.0
        %1772 = vmatpush.msra.mxu0 %v1753
        %1773 = vmatpush.msra.mxu0 %v1752
        %1774 = vmatpush.msra.mxu0 %v1751
        %1775 = vmatpush.msra.mxu0 %v1750
        %1776 = vmatmul.f32.gmra.mxu0 %v1755
        %v1777 = vpop.f32.mrf.mxu0
        %v1778 = vadd.f32 0.0, %v1777
        %1779 = vmatmul.f32.gmra.mxu0 %v1758
        %v1780 = vpop.f32.mrf.mxu0
        %v1781 = vadd.f32 0.0, %v1780
        %1782 = vdwg.mxu0
        %1785 = vrot.lane.b32.xlu0 %v1778, 64
        %v1786 = vpop.permute.xlu0 %1785
        %1787 = vrot.lane.b32.xlu0 %v1781, 64
        %v1788 = vpop.permute.xlu0 %1787
        %v1791 = vadd.f32 %v1659, %v1786
        %v1792 = vadd.f32 %v1662, %v1788
        %v1793 = vtanh.pop %v1791
        %v1794 = vtanh.pop %v1792
        %v1795 = vmul.f32 %v1707, %v969
        %v1796 = vmul.f32 %v1708, %v970
        %v1797 = vsub.f32 1.0, %v1707
        %v1798 = vsub.f32 1.0, %v1708
        %1801 = vrot.lane.b32.xlu0 %v1793, 64
        %v1802 = vpop.permute.xlu0 %1801
        %1803 = vrot.lane.b32.xlu0 %v1794, 64
        %v1804 = vpop.permute.xlu0 %1803
        %v1807 = vmul.f32 %v1797, %v1802
        %v1808 = vmul.f32 %v1798, %v1804
        %v1809 = vadd.f32 %v1795, %v1807
        %v1810 = vadd.f32 %v1796, %v1808
        %1811 = vmatpush.msra.mxu0 0.0
        %1812 = vmatpush.msra.mxu0 0.0
        %1813 = vmatpush.msra.mxu0 0.0
        %1814 = vmatpush.msra.mxu0 0.0
        %1815 = vmatpush.msra.mxu0 0.0
        %1816 = vmatpush.msra.mxu0 0.0
        %1817 = vmatpush.msra.mxu0 0.0
        %1818 = vmatpush.msra.mxu0 0.0
        %1819 = vmatpush.msra.mxu0 0.0
        %1820 = vmatpush.msra.mxu0 0.0
        %1821 = vmatpush.msra.mxu0 0.0
        %1822 = vmatpush.msra.mxu0 0.0
        %1823 = vmatpush.msra.mxu0 0.0
        %1824 = vmatpush.msra.mxu0 0.0
        %1825 = vmatpush.msra.mxu0 %v1810
        %1826 = vmatpush.msra.mxu0 %v1809
        %1827 = vmatmul.f32.gmra.mxu0 %v976
        %v1828 = vpop.f32.mrf.mxu0
        %v1829 = vadd.f32 0.0, %v1828
        %1830 = vmatmul.f32.gmra.mxu0 %v979
        %v1831 = vpop.f32.mrf.mxu0
        %v1832 = vadd.f32 0.0, %v1831
        %1833 = vdwg.mxu0
        %v1834 = vld [vmem:[%s21] sm:$0xff]
        %v1835 = vld [vmem:[%s21 + $0x8] sm:$0xff]
        %v1836 = vld [vmem:[%s21 + $0x10] sm:$0xff]
        %v1837 = vld [vmem:[%s21 + $0x18] sm:$0xff]
        %v1839 = vsel %vm1058, %v1829, 0
        %v1842 = vsel %vm1058, %v1832, 0
        %1844 = vmatpush.msra.mxu0 0.0
        %1845 = vmatpush.msra.mxu0 0.0
        %1846 = vmatpush.msra.mxu0 0.0
        %1847 = vmatpush.msra.mxu0 0.0
        %1848 = vmatpush.msra.mxu0 0.0
        %1849 = vmatpush.msra.mxu0 0.0
        %1850 = vmatpush.msra.mxu0 0.0
        %1851 = vmatpush.msra.mxu0 0.0
        %1852 = vmatpush.msra.mxu0 0.0
        %1853 = vmatpush.msra.mxu0 0.0
        %1854 = vmatpush.msra.mxu0 0.0
        %1855 = vmatpush.msra.mxu0 0.0
        %1856 = vmatpush.msra.mxu0 %v1837
        %1857 = vmatpush.msra.mxu0 %v1836
        %1858 = vmatpush.msra.mxu0 %v1835
        %1859 = vmatpush.msra.mxu0 %v1834
        %1860 = vmatmul.f32.gmra.mxu0 %v1839
        %v1861 = vpop.f32.mrf.mxu0
        %v1862 = vadd.f32 0.0, %v1861
        %1863 = vmatmul.f32.gmra.mxu0 %v1842
        %v1864 = vpop.f32.mrf.mxu0
        %v1865 = vadd.f32 0.0, %v1864
        %1866 = vdwg.mxu0
        %v1867 = vld [vmem:[%s22] sm:$0xff]
        %v1868 = vld [vmem:[%s22 + $0x8] sm:$0xff]
        %v1869 = vld [vmem:[%s22 + $0x10] sm:$0xff]
        %v1870 = vld [vmem:[%s22 + $0x18] sm:$0xff]
        %1871 = vmatpush.msra.mxu0 0.0
        %1872 = vmatpush.msra.mxu0 0.0
        %1873 = vmatpush.msra.mxu0 0.0
        %1874 = vmatpush.msra.mxu0 0.0
        %1875 = vmatpush.msra.mxu0 0.0
        %1876 = vmatpush.msra.mxu0 0.0
        %1877 = vmatpush.msra.mxu0 0.0
        %1878 = vmatpush.msra.mxu0 0.0
        %1879 = vmatpush.msra.mxu0 0.0
        %1880 = vmatpush.msra.mxu0 0.0
        %1881 = vmatpush.msra.mxu0 0.0
        %1882 = vmatpush.msra.mxu0 0.0
        %1883 = vmatpush.msra.mxu0 %v1870
        %1884 = vmatpush.msra.mxu0 %v1869
        %1885 = vmatpush.msra.mxu0 %v1868
        %1886 = vmatpush.msra.mxu0 %v1867
        %1887 = vmatmul.f32.gmra.mxu0 %v1060
        %v1888 = vpop.f32.mrf.mxu0
        %v1889 = vadd.f32 0.0, %v1888
        %1890 = vmatmul.f32.gmra.mxu0 %v1063
        %v1891 = vpop.f32.mrf.mxu0
        %v1892 = vadd.f32 0.0, %v1891
        %1893 = vdwg.mxu0
        %v1894 = vadd.f32 %v1862, %v1889
        %v1895 = vadd.f32 %v1865, %v1892
        %v1896 = vsub.f32 0.0, %v1894
        %v1897 = vsub.f32 0.0, %v1895
        %v1898 = vmul.f32 %v1896, 1.442695
        %v1899 = vpow.pop %v1898
        %v1900 = vmul.f32 %v1897, 1.442695
        %v1901 = vpow.pop %v1900
        %v1902 = vadd.f32 %v1899, 1.0
        %v1903 = vadd.f32 %v1901, 1.0
        %v1904 = vrcp.pop %v1902
        %v1905 = vrcp.pop %v1903
        %1906 = vrot.lane.b32.xlu0 %v972, 32
        %v1907 = vpop.permute.xlu0 %1906
        %1908 = vrot.lane.b32.xlu0 %v973, 32
        %v1909 = vpop.permute.xlu0 %1908
        %v1912 = vmul.f32 %v1904, %v1907
        %v1913 = vmul.f32 %v1905, %v1909
        %1916 = vrot.lane.b32.xlu0 %v1912, 96
        %v1917 = vpop.permute.xlu0 %1916
        %1918 = vrot.lane.b32.xlu0 %v1913, 96
        %v1919 = vpop.permute.xlu0 %1918
        %1922 = vmatpush.msra.mxu0 0.0
        %1923 = vmatpush.msra.mxu0 0.0
        %1924 = vmatpush.msra.mxu0 0.0
        %1925 = vmatpush.msra.mxu0 0.0
        %1926 = vmatpush.msra.mxu0 0.0
        %1927 = vmatpush.msra.mxu0 0.0
        %1928 = vmatpush.msra.mxu0 0.0
        %1929 = vmatpush.msra.mxu0 0.0
        %1930 = vmatpush.msra.mxu0 0.0
        %1931 = vmatpush.msra.mxu0 0.0
        %1932 = vmatpush.msra.mxu0 0.0
        %1933 = vmatpush.msra.mxu0 0.0
        %1934 = vmatpush.msra.mxu0 0.0
        %1935 = vmatpush.msra.mxu0 0.0
        %1936 = vmatpush.msra.mxu0 %v1919
        %1937 = vmatpush.msra.mxu0 %v1917
        %1938 = vmatmul.f32.gmra.mxu0 %v976
        %v1939 = vpop.f32.mrf.mxu0
        %v1940 = vadd.f32 0.0, %v1939
        %1941 = vmatmul.f32.gmra.mxu0 %v979
        %v1942 = vpop.f32.mrf.mxu0
        %v1943 = vadd.f32 0.0, %v1942
        %1944 = vdwg.mxu0
        %v1945 = vld [vmem:[%s23] sm:$0xff]
        %v1946 = vld [vmem:[%s23 + $0x8] sm:$0xff]
        %v1947 = vld [vmem:[%s23 + $0x10] sm:$0xff]
        %v1948 = vld [vmem:[%s23 + $0x18] sm:$0xff]
        %v1950 = vsel %vm1058, %v1940, 0
        %v1953 = vsel %vm1058, %v1943, 0
        %1955 = vmatpush.msra.mxu0 0.0
        %1956 = vmatpush.msra.mxu0 0.0
        %1957 = vmatpush.msra.mxu0 0.0
        %1958 = vmatpush.msra.mxu0 0.0
        %1959 = vmatpush.msra.mxu0 0.0
        %1960 = vmatpush.msra.mxu0 0.0
        %1961 = vmatpush.msra.mxu0 0.0
        %1962 = vmatpush.msra.mxu0 0.0
        %1963 = vmatpush.msra.mxu0 0.0
        %1964 = vmatpush.msra.mxu0 0.0
        %1965 = vmatpush.msra.mxu0 0.0
        %1966 = vmatpush.msra.mxu0 0.0
        %1967 = vmatpush.msra.mxu0 %v1948
        %1968 = vmatpush.msra.mxu0 %v1947
        %1969 = vmatpush.msra.mxu0 %v1946
        %1970 = vmatpush.msra.mxu0 %v1945
        %1971 = vmatmul.f32.gmra.mxu0 %v1950
        %v1972 = vpop.f32.mrf.mxu0
        %v1973 = vadd.f32 0.0, %v1972
        %1974 = vmatmul.f32.gmra.mxu0 %v1953
        %v1975 = vpop.f32.mrf.mxu0
        %v1976 = vadd.f32 0.0, %v1975
        %1977 = vdwg.mxu0
        %1980 = vrot.lane.b32.xlu0 %v1973, 64
        %v1981 = vpop.permute.xlu0 %1980
        %1982 = vrot.lane.b32.xlu0 %v1976, 64
        %v1983 = vpop.permute.xlu0 %1982
        %v1986 = vadd.f32 %v1862, %v1981
        %v1987 = vadd.f32 %v1865, %v1983
        %v1988 = vtanh.pop %v1986
        %v1989 = vtanh.pop %v1987
        %v1990 = vmul.f32 %v1904, %v972
        %v1991 = vmul.f32 %v1905, %v973
        %v1992 = vsub.f32 1.0, %v1904
        %v1993 = vsub.f32 1.0, %v1905
        %1996 = vrot.lane.b32.xlu0 %v1988, 64
        %v1997 = vpop.permute.xlu0 %1996
        %1998 = vrot.lane.b32.xlu0 %v1989, 64
        %v1999 = vpop.permute.xlu0 %1998
        %v2002 = vmul.f32 %v1992, %v1997
        %v2003 = vmul.f32 %v1993, %v1999
        %v2004 = vadd.f32 %v1990, %v2002
        %v2005 = vadd.f32 %v1991, %v2003
        %2006 = vst.msk [vmem:[#allocation2] sm:$0xff] %vm1058, %v1809
        %2007 = vst.msk [vmem:[#allocation2 + $0x8] sm:$0xff] %vm1058, %v1810
        %2008 = vst.msk [vmem:[%s971] sm:$0xff] %vm1058, %v2004
        %2009 = vst.msk [vmem:[%s971 + $0x8] sm:$0xff] %vm1058, %v2005
        %2010 = vst.msk [vmem:[%s906] sm:$0xff] %vm974, %v1185
        %2011 = vst.msk [vmem:[%s906 + $0x8] sm:$0xff] %vm974, %v1186
        %2012 = vst.msk [vmem:[%s911] sm:$0xff] %vm974, %v1276
        %2013 = vst.msk [vmem:[%s911 + $0x8] sm:$0xff] %vm974, %v1279
        %p2014 = scmp.lt.s32.totalorder %s42, 3
        %s2015 = scalar_select %p2014, %s42, 3
        %s2016 = smul.addr %s2015, 2
        %s2017 = smul.addr %s2016, 8
        %s2018 = scalar_lea.vmem %s24, %s2017
        %p2019 = scmp.lt.s32.totalorder %s42, 3
        %s2020 = scalar_select %p2019, %s42, 3
        %s2021 = smul.addr %s2020, 2
        %s2022 = smul.addr %s2021, 8
        %s2023 = scalar_lea.vmem %s25, %s2022
        // Predicated region
        $region121: #{vgrnn_forward.1} parent=115 // pred_check
          %p2024 = pneg %p584
        $region122: #{vgrnn_forward.1} parent=115 // pred_check_branch
          %2026 = sbr.rel (%p2024) target = $region124
        $region123: #{vgrnn_forward.1} parent=115 // pred_region
          _
        $region124: #{vgrnn_forward.1} parent=115 // pred_fallthru
          _
        // Predicated region
        $region125: #{vgrnn_forward.1} parent=115 // pred_check
          %p2027 = pneg %p610
        $region126: #{vgrnn_forward.1} parent=115 // pred_check_branch
          %2029 = sbr.rel (%p2027) target = $region128
        $region127: #{vgrnn_forward.1} parent=115 // pred_region
          _
        $region128: #{vgrnn_forward.1} parent=115 // pred_fallthru
          _
        // Predicated region
        $region129: #{vgrnn_forward.1} parent=115 // pred_check
          %p2030 = pneg %p631
        $region130: #{vgrnn_forward.1} parent=115 // pred_check_branch
          %2032 = sbr.rel (%p2030) target = $region132
        $region131: #{vgrnn_forward.1} parent=115 // pred_region
          %2034 = vsyncadd [#allocation3], 0
          %s2035 = sshll.u32 [#allocation2], 4
          %s2036 = int_to_ptr.vmem [resolvable:$true] %s2035
          %s2037 = sshll.u32 %s26, 4
          %s2038 = int_to_ptr.hbm [resolvable:$true] %s2037
          %2043 = dma.vmem_to_hbm [thread:$0]  %s2036, 512, %s2038, [#allocation3], 128, 128, 8
        $region132: #{vgrnn_forward.1} parent=115 // pred_fallthru
          _
        // Predicated region
        $region133: #{vgrnn_forward.1} parent=115 // pred_check
          %p2044 = pneg %p652
        $region134: #{vgrnn_forward.1} parent=115 // pred_check_branch
          %2046 = sbr.rel (%p2044) target = $region136
        $region135: #{vgrnn_forward.1} parent=115 // pred_region
          %2048 = vsyncadd [#allocation5], 0
          %s2050 = sshll.u32 [#allocation4], 4
          %s2051 = int_to_ptr.vmem [resolvable:$true] %s2050
          %s2052 = sshll.u32 %s27, 4
          %s2053 = int_to_ptr.hbm [resolvable:$true] %s2052
          %2055 = dma.vmem_to_hbm [thread:$0]  %s2051, 16, %s2053, [#allocation5]
        $region136: #{vgrnn_forward.1} parent=115 // pred_fallthru
          _
        // Predicated region
        $region137: #{vgrnn_forward.1} parent=115 // pred_check
          %p2056 = pneg %p673
        $region138: #{vgrnn_forward.1} parent=115 // pred_check_branch
          %2058 = sbr.rel (%p2056) target = $region140
        $region139: #{vgrnn_forward.1} parent=115 // pred_region
          %2060 = vsyncadd [#allocation5], 0
          %s2062 = sshll.u32 [#allocation6], 4
          %s2063 = int_to_ptr.vmem [resolvable:$true] %s2062
          %s2064 = sshll.u32 %s28, 4
          %s2065 = int_to_ptr.hbm [resolvable:$true] %s2064
          %2067 = dma.vmem_to_hbm [thread:$0]  %s2063, 16, %s2065, [#allocation5]
        $region140: #{vgrnn_forward.1} parent=115 // pred_fallthru
          _
        // Predicated region
        $region141: #{vgrnn_forward.1} parent=115 // pred_check
          %p2068 = pneg %p631
        $region142: #{vgrnn_forward.1} parent=115 // pred_check_branch
          %2070 = sbr.rel (%p2068) target = $region144
        $region143: #{vgrnn_forward.1} parent=115 // pred_region
          %2072 = dma.done [#allocation3], 512
        $region144: #{vgrnn_forward.1} parent=115 // pred_fallthru
          _
        // Predicated region
        $region145: #{vgrnn_forward.1} parent=115 // pred_check
          %p2073 = pneg %p652
        $region146: #{vgrnn_forward.1} parent=115 // pred_check_branch
          %2075 = sbr.rel (%p2073) target = $region148
        $region147: #{vgrnn_forward.1} parent=115 // pred_region
          %2077 = dma.done [#allocation5], 16
        $region148: #{vgrnn_forward.1} parent=115 // pred_fallthru
          _
        // Predicated region
        $region149: #{vgrnn_forward.1} parent=115 // pred_check
          %p2078 = pneg %p673
        $region150: #{vgrnn_forward.1} parent=115 // pred_check_branch
          %2080 = sbr.rel (%p2078) target = $region152
        $region151: #{vgrnn_forward.1} parent=115 // pred_region
          %2082 = dma.done [#allocation5], 16
        $region152: #{vgrnn_forward.1} parent=115 // pred_fallthru
          _
      $region116: #{vgrnn_forward.1} parent=5 // pred_fallthru
        _
      %p2083 = scmp.le.s32.totalorder 2, %s37
      // Predicated region
      $region153: #{vgrnn_forward.1} parent=5 // pred_check
        %p2084 = pneg %p2083
      $region154: #{vgrnn_forward.1} parent=5 // pred_check_branch
        %2086 = sbr.rel (%p2084) target = $region156
      $region155: #{vgrnn_forward.1} parent=5 // pred_region
        %s2087 = ssub.s32 %s37, 2
        // Predicated region
        $region157: #{vgrnn_forward.1} parent=155 // pred_check
          %p2088 = pneg %p590
        $region158: #{vgrnn_forward.1} parent=155 // pred_check_branch
          %2090 = sbr.rel (%p2088) target = $region160
        $region159: #{vgrnn_forward.1} parent=155 // pred_region
          %p2091 = scmp.lt.s32.totalorder %s43, 3
          %s2092 = scalar_select %p2091, %s43, 3
          %s2093 = smul.addr %s2092, 2
          %s2094 = smul.addr %s2093, 8
          %s2095 = scalar_lea.vmem %s24, %s2094
        $region160: #{vgrnn_forward.1} parent=155 // pred_fallthru
          _
        // Predicated region
        $region161: #{vgrnn_forward.1} parent=155 // pred_check
          %p2096 = pneg %p616
        $region162: #{vgrnn_forward.1} parent=155 // pred_check_branch
          %2098 = sbr.rel (%p2096) target = $region164
        $region163: #{vgrnn_forward.1} parent=155 // pred_region
          %p2099 = scmp.lt.s32.totalorder %s43, 3
          %s2100 = scalar_select %p2099, %s43, 3
          %s2101 = smul.addr %s2100, 2
          %s2102 = smul.addr %s2101, 8
          %s2103 = scalar_lea.vmem %s25, %s2102
        $region164: #{vgrnn_forward.1} parent=155 // pred_fallthru
          _
      $region156: #{vgrnn_forward.1} parent=5 // pred_fallthru
        _
    $region6: #{vgrnn_forward.1} parent=1 // loop_footer
      %s41 = sadd.s32 1, %s37
    $region7: #{vgrnn_forward.1} parent=1 // loop_footer_branch
      %36 = sbr.rel target = $region3
    $region8: #{vgrnn_forward.1} parent=1 // loop_exit
      _
    %2104 = vsyncpa [#allocation3], 1
    %s2105 = scalar_lea.sflag [#allocation3], 1
    %2106 = vsyncpa %s2105, 1
    %2107 = vsyncpa [#allocation5], 1

</llo_original>
